<compile_context>
chip_gen: v6e
topology: v6e:2x2x1
jax: 0.10.0
libtpu: 0.0.40
codegen_flags: <defaults>
</compile_context>

<pallas_src>
import functools

import jax
import jax.numpy as jnp
import numpy as np
from jax.experimental import pallas as pl
from jax.experimental.pallas import tpu as pltpu


def _round_up(a, m):
    return (a + m - 1) // m * m


# ----------------------------- Pallas kernel --------------------------------------


def _sspcab_kernel(x_ref, w_ref, bsum_ref, w1_ref, b1_ref, w2_ref, b2_ref, o_ref,
                   xp_scratch, *, pad, border):
    """Fused SSPCAB forward for `nb` batch images per grid step.

    x_ref      : (nb, H, W, C)        unpadded NHWC input block (f32)
    w_ref      : (4C, C)   bf16       packed 1x1 conv weights (rows k*C+cin -> conv_k)
    bsum_ref   : (1, C)    f32        b1 + b2 + b3 + b4 (all biases add before ReLU)
    w1_ref     : (C, Cr)   bf16 ; b1_ref : (1, Cr) f32   SE fc1
    w2_ref     : (Cr, C)   bf16 ; b2_ref : (1, C)  f32   SE fc2
    o_ref      : (nb, H, W, C)
    xp_scratch : (nb, Hp, Wpp, C) bf16  zero-padded staging tile (in-kernel padding)
    """
    nb, H, W, C = o_ref.shape
    hw = H * W
    b = border

    # In-kernel zero padding: zero the staging tile (cheap, full-width stores; done
    # every step so it is correct under megacore grid sharding) and write the input
    # block -- cast once to bf16 -- into the interior.
    xp_scratch[...] = jnp.zeros_like(xp_scratch)
    xp_scratch[:, pad:pad + H, pad:pad + W, :] = x_ref[...].astype(jnp.bfloat16)

    # Column (sublane) slices taken once per offset, reused for both row shifts.
    left = xp_scratch[:, :, 0:W, :]        # (nb, Hp, W, C)
    right = xp_scratch[:, :, b:b + W, :]   # (nb, Hp, W, C)

    # Lane-concatenate the 4 shifted sub-kernel views -> one K=4C MXU matmul.
    lhs = jnp.concatenate(
        [left[:, 0:H], left[:, b:b + H], right[:, 0:H], right[:, b:b + H]],
        axis=-1).reshape(nb * hw, 4 * C)                        # (nb*H*W, 4C) bf16

    y = jnp.dot(lhs, w_ref[...], preferred_element_type=jnp.float32)
    y = jnp.maximum(y + bsum_ref[...], 0.0)                     # (nb*H*W, C) f32

    # SE layer: per-image global average pool -> fc1 -> ReLU -> fc2 -> sigmoid.
    y3 = y.reshape(nb, hw, C)
    sq = jnp.sum(y3, axis=1) * (1.0 / float(hw))                # (nb, C) f32
    h1 = jnp.maximum(
        jnp.dot(sq.astype(jnp.bfloat16), w1_ref[...],
                preferred_element_type=jnp.float32) + b1_ref[...], 0.0)     # (nb, Cr)
    g = jax.nn.sigmoid(
        jnp.dot(h1.astype(jnp.bfloat16), w2_ref[...],
                preferred_element_type=jnp.float32) + b2_ref[...])          # (nb, C)

    o_ref[...] = (y3 * g[:, None, :]).reshape(nb, H, W, C).astype(o_ref.dtype)


# ----------------------------- wrappers ---------------------------------------------


def sspcab_forward_nhwc(x, params, *, kernel_dim=1, dilation=1, batch_block=8):
    """Core NHWC entry point (no pad / transpose HBM passes in the wrapper)."""
    assert kernel_dim == 1, "TODO(synk): kernel_dim > 1 not implemented"
    pad = kernel_dim + dilation
    border = kernel_dim + 2 * dilation + 1

    N, H, W, C = x.shape
    nb = min(batch_block, N)
    while N % nb:                       # largest divisor of N not exceeding batch_block
        nb -= 1
    Hp = H + 2 * pad
    Wpp = _round_up(W + 2 * pad, 8)     # sublane-aligned staging row width (20 -> 24)

    # Pre-packed operands (bf16 weights halve constant-block VMEM + DMA bytes).
    w_packed = params["conv_w"].reshape(4 * C, C).astype(jnp.bfloat16)   # (4C, C)
    bsum = jnp.sum(params["conv_b"], axis=0).reshape(1, C)               # biases add pre-ReLU
    w1 = params["se_w1"].astype(jnp.bfloat16)                            # (C, Cr)
    w2 = params["se_w2"].astype(jnp.bfloat16)                            # (Cr, C)
    Cr = w1.shape[1]
    b1 = params["se_b1"].reshape(1, Cr)
    b2 = params["se_b2"].reshape(1, C)

    cost = pl.CostEstimate(
        flops=2 * N * H * W * C * 4 * C + 2 * N * (C * Cr + Cr * C),
        transcendentals=N * C,
        bytes_accessed=4 * N * H * W * C * 2
        + 2 * (4 * C * C + C * Cr + Cr * C) + 4 * (3 * C + Cr),
    )

    kernel = functools.partial(_sspcab_kernel, pad=pad, border=border)
    return pl.pallas_call(
        kernel,
        out_shape=jax.ShapeDtypeStruct((N, H, W, C), x.dtype),
        grid=(N // nb,),
        in_specs=[
            pl.BlockSpec((nb, H, W, C), lambda n: (n, 0, 0, 0)),
            pl.BlockSpec((4 * C, C), lambda n: (0, 0)),
            pl.BlockSpec((1, C), lambda n: (0, 0)),
            pl.BlockSpec((C, Cr), lambda n: (0, 0)),
            pl.BlockSpec((1, Cr), lambda n: (0, 0)),
            pl.BlockSpec((Cr, C), lambda n: (0, 0)),
            pl.BlockSpec((1, C), lambda n: (0, 0)),
        ],
        out_specs=pl.BlockSpec((nb, H, W, C), lambda n: (n, 0, 0, 0)),
        scratch_shapes=[pltpu.VMEM((nb, Hp, Wpp, C), jnp.bfloat16)],
        compiler_params=pltpu.CompilerParams(dimension_semantics=("parallel",)),
        cost_estimate=cost,
    )(x, w_packed, bsum, w1, b1, w2, b2)


def sspcab_forward(x_nchw, params, *, kernel_dim=1, dilation=1, batch_block=8):
    """NCHW adapter matching the PyTorch contract.

    Prefer `sspcab_forward_nhwc` end-to-end when the surrounding model allows it -- the
    two transposes here are full HBM passes that only exist for layout parity.
    """
    x = jnp.transpose(x_nchw, (0, 2, 3, 1))                   # NCHW -> NHWC
    y = sspcab_forward_nhwc(x, params, kernel_dim=kernel_dim, dilation=dilation,
                            batch_block=batch_block)
    return jnp.transpose(y, (0, 3, 1, 2))                     # NHWC -> NCHW


# ----------------------------- deterministic params --------------------------------


def init_params(key, channels, reduction_ratio=8):
    cr = channels // reduction_ratio
    ks = jax.random.split(key, 6)

    def lin(k, cin, cout):
        return jax.random.normal(k, (cin, cout), jnp.float32) / np.sqrt(cin).astype(np.float32)

    conv_w = jnp.stack([lin(k, channels, channels) for k in jax.random.split(ks[0], 4)])
    conv_b = 0.05 * jax.random.normal(ks[1], (4, channels), jnp.float32)
    return {
        "conv_w": conv_w,                                            # (4, Cin, Cout)
        "conv_b": conv_b,                                            # (4, C)
        "se_w1": lin(ks[2], channels, cr),                           # (C, Cr)
        "se_b1": 0.05 * jax.random.normal(ks[3], (cr,), jnp.float32),
        "se_w2": lin(ks[4], cr, channels),                           # (Cr, C)
        "se_b2": 0.05 * jax.random.normal(ks[5], (channels,), jnp.float32),
    }


# ----------------------------- numpy reference --------------------------------------


def _bf16_round(a):
    return np.asarray(jnp.asarray(np.asarray(a, np.float32))
                      .astype(jnp.bfloat16).astype(jnp.float32))


def sspcab_reference(x_nchw, params, *, kernel_dim=1, dilation=1, bf16_operands=False):
    """Pure-numpy SSPCAB forward.  bf16_operands=True emulates the kernel's bf16 matmul
    inputs (f32 accumulation), giving a tight bit-level-ish comparison target."""
    q = _bf16_round if bf16_operands else (lambda a: np.asarray(a, np.float32))
    pad = kernel_dim + dilation
    border = kernel_dim + 2 * dilation + 1
    x = q(np.asarray(x_nchw, np.float32))
    N, C, H, W = x.shape
    xp = np.pad(x, ((0, 0), (0, 0), (pad, pad), (pad, pad)))
    xp = np.transpose(xp, (0, 2, 3, 1))                              # NHWC
    w = q(params["conv_w"])
    bias = np.asarray(params["conv_b"], np.float32)
    views = [
        xp[:, 0:H,               0:W],
        xp[:, border:border + H, 0:W],
        xp[:, 0:H,               border:border + W],
        xp[:, border:border + H, border:border + W],
    ]
    y = sum(views[k] @ w[k] for k in range(4)) + bias.sum(axis=0)
    y = np.maximum(y, 0.0)                                           # (N, H, W, C)
    sq = y.mean(axis=(1, 2))                                         # (N, C)
    w1, w2 = q(params["se_w1"]), q(params["se_w2"])
    b1 = np.asarray(params["se_b1"], np.float32)
    b2 = np.asarray(params["se_b2"], np.float32)
    h1 = np.maximum(q(sq) @ w1 + b1, 0.0)
    g = 1.0 / (1.0 + np.exp(-(q(h1) @ w2 + b2)))
    out = y * g[:, None, None, :]
    return np.transpose(out, (0, 3, 1, 2))                           # NCHW


# ----------------------------- demo -------------------------------------------------


if __name__ == "__main__":
    # C = 128 keeps every matmul operand and the output store lane-dense on TPU and
    # satisfies C % reduction_ratio == 0.
    channels, reduction_ratio = 128, 8
    kernel_dim, dilation = 1, 1
    N, H, W = 2, 16, 16

    key = jax.random.PRNGKey(0)
    kx, kp = jax.random.split(key)
    x = jax.random.normal(kx, (N, channels, H, W), jnp.float32)      # NCHW, like PyTorch
    params = init_params(kp, channels, reduction_ratio)

    fwd = jax.jit(functools.partial(sspcab_forward, kernel_dim=kernel_dim,
                                    dilation=dilation))
    out = fwd(x, params)
    jax.block_until_ready(out)

    assert out.shape == (N, channels, H, W), out.shape
    out_np = np.asarray(out)
    assert np.all(np.isfinite(out_np))

    # Tight check against a reference that emulates the kernel's bf16 matmul operands.
    ref_bf16 = sspcab_reference(x, params, kernel_dim=kernel_dim, dilation=dilation,
                                bf16_operands=True)
    err_bf16 = float(np.max(np.abs(out_np - ref_bf16)))
    assert err_bf16 < 1e-2, f"max abs error vs bf16-operand reference: {err_bf16}"

    # Loose check against the exact f32 module semantics (bf16 operand rounding only).
    ref_f32 = sspcab_reference(x, params, kernel_dim=kernel_dim, dilation=dilation,
                               bf16_operands=False)
    err_f32 = float(np.max(np.abs(out_np - ref_f32)))
    assert err_f32 < 2.5e-1, f"max abs error vs f32 reference: {err_f32}"

    print("KERNEL_OK")
</pallas_src>

<mosaic_0001>
module attributes {stable_mosaic.version = 11 : i64} {
  func.func @_sspcab_kernel(%arg0: i32, %arg1: memref<2x16x16x128xf32, #tpu.memory_space<vmem>>, %arg2: memref<512x128xbf16, #tpu.memory_space<vmem>>, %arg3: memref<1x128xf32, #tpu.memory_space<vmem>>, %arg4: memref<128x16xbf16, #tpu.memory_space<vmem>>, %arg5: memref<1x16xf32, #tpu.memory_space<vmem>>, %arg6: memref<16x128xbf16, #tpu.memory_space<vmem>>, %arg7: memref<1x128xf32, #tpu.memory_space<vmem>>, %arg8: memref<2x16x16x128xf32, #tpu.memory_space<vmem>>, %arg9: memref<2x20x24x128xbf16, #tpu.memory_space<vmem>>) attributes {dimension_semantics = [#tpu.dimension_semantics<parallel>], iteration_bounds = array<i64: 1>, scalar_prefetch = 0 : i64, scratch_operands = 1 : i64, tpu.core_type = #tpu.core_type<tc>, window_params = [{transform_indices = @transform_0, window_bounds = array<i64: 2, 16, 16, 128>}, {pipeline_mode = #tpu.pipeline_mode<synchronous>, transform_indices = @transform_1, window_bounds = array<i64: 512, 128>}, {pipeline_mode = #tpu.pipeline_mode<synchronous>, transform_indices = @transform_2, window_bounds = array<i64: 1, 128>}, {pipeline_mode = #tpu.pipeline_mode<synchronous>, transform_indices = @transform_3, window_bounds = array<i64: 128, 16>}, {pipeline_mode = #tpu.pipeline_mode<synchronous>, transform_indices = @transform_4, window_bounds = array<i64: 1, 16>}, {pipeline_mode = #tpu.pipeline_mode<synchronous>, transform_indices = @transform_5, window_bounds = array<i64: 16, 128>}, {pipeline_mode = #tpu.pipeline_mode<synchronous>, transform_indices = @transform_6, window_bounds = array<i64: 1, 128>}, {transform_indices = @transform_7, window_bounds = array<i64: 2, 16, 16, 128>}]} {
    %cst = arith.constant 0.000000e+00 : bf16
    %0 = vector.broadcast %cst : bf16 to vector<2x20x24x128xbf16>
    %c0 = arith.constant 0 : index
    %c0_0 = arith.constant 0 : index
    %c0_1 = arith.constant 0 : index
    %c0_2 = arith.constant 0 : index
    %1 = vector.load %arg9[%c0, %c0_0, %c0_1, %c0_2] : memref<2x20x24x128xbf16, #tpu.memory_space<vmem>>, vector<2x20x24x128xbf16>
    tpu.vector_store %arg9[%c0, %c0_0, %c0_1, %c0_2], %0 {strides = array<i32>} : memref<2x20x24x128xbf16, #tpu.memory_space<vmem>>, vector<2x20x24x128xbf16>,
    %c0_3 = arith.constant 0 : index
    %c0_4 = arith.constant 0 : index
    %c0_5 = arith.constant 0 : index
    %c0_6 = arith.constant 0 : index
    %2 = vector.load %arg1[%c0_3, %c0_4, %c0_5, %c0_6] : memref<2x16x16x128xf32, #tpu.memory_space<vmem>>, vector<2x16x16x128xf32>
    %3 = arith.truncf %2 : vector<2x16x16x128xf32> to vector<2x16x16x128xbf16>
    %c0_7 = arith.constant 0 : index
    %c2 = arith.constant 2 : index
    %c2_8 = arith.constant 2 : index
    %c0_9 = arith.constant 0 : index
    %4 = vector.load %arg9[%c0_7, %c2, %c2_8, %c0_9] : memref<2x20x24x128xbf16, #tpu.memory_space<vmem>>, vector<2x16x16x128xbf16>
    tpu.vector_store %arg9[%c0_7, %c2, %c2_8, %c0_9], %3 {strides = array<i32>} : memref<2x20x24x128xbf16, #tpu.memory_space<vmem>>, vector<2x16x16x128xbf16>,
    %c0_10 = arith.constant 0 : index
    %c0_11 = arith.constant 0 : index
    %c0_12 = arith.constant 0 : index
    %c0_13 = arith.constant 0 : index
    %5 = vector.load %arg9[%c0_10, %c0_11, %c0_12, %c0_13] : memref<2x20x24x128xbf16, #tpu.memory_space<vmem>>, vector<2x20x16x128xbf16>
    %c0_14 = arith.constant 0 : index
    %c0_15 = arith.constant 0 : index
    %c4 = arith.constant 4 : index
    %c0_16 = arith.constant 0 : index
    %6 = vector.load %arg9[%c0_14, %c0_15, %c4, %c0_16] : memref<2x20x24x128xbf16, #tpu.memory_space<vmem>>, vector<2x20x16x128xbf16>
    %7 = vector.extract_strided_slice %5 {offsets = [0, 0, 0, 0], sizes = [2, 16, 16, 128], strides = [1, 1, 1, 1]} : vector<2x20x16x128xbf16> to vector<2x16x16x128xbf16>
    %8 = vector.extract_strided_slice %5 {offsets = [0, 4, 0, 0], sizes = [2, 16, 16, 128], strides = [1, 1, 1, 1]} : vector<2x20x16x128xbf16> to vector<2x16x16x128xbf16>
    %9 = vector.extract_strided_slice %6 {offsets = [0, 0, 0, 0], sizes = [2, 16, 16, 128], strides = [1, 1, 1, 1]} : vector<2x20x16x128xbf16> to vector<2x16x16x128xbf16>
    %10 = vector.extract_strided_slice %6 {offsets = [0, 4, 0, 0], sizes = [2, 16, 16, 128], strides = [1, 1, 1, 1]} : vector<2x20x16x128xbf16> to vector<2x16x16x128xbf16>
    %11 = tpu.concatenate %7, %8, %9, %10 in 3 : vector<2x16x16x128xbf16>, vector<2x16x16x128xbf16>, vector<2x16x16x128xbf16>, vector<2x16x16x128xbf16> -> vector<2x16x16x512xbf16>
    %12 = vector.shape_cast %11 : vector<2x16x16x512xbf16> to vector<512x512xbf16>
    %c0_17 = arith.constant 0 : index
    %c0_18 = arith.constant 0 : index
    %13 = vector.load %arg2[%c0_17, %c0_18] : memref<512x128xbf16, #tpu.memory_space<vmem>>, vector<512x128xbf16>
    %cst_19 = arith.constant dense<0.000000e+00> : vector<512x128xf32>
    %14 = tpu.matmul %12, %13, %cst_19 {dimension_numbers = #tpu.dot_dimension_numbers<[1], [0], [0], [1], [0, 0, 1, 1], [], []>} : vector<512x512xbf16>, vector<512x128xbf16>, vector<512x128xf32> -> vector<512x128xf32>
    %c0_20 = arith.constant 0 : index
    %c0_21 = arith.constant 0 : index
    %15 = vector.load %arg3[%c0_20, %c0_21] : memref<1x128xf32, #tpu.memory_space<vmem>>, vector<1x128xf32>
    %16 = vector.broadcast %15 : vector<1x128xf32> to vector<512x128xf32>
    %17 = arith.addf %14, %16 : vector<512x128xf32>
    %cst_22 = arith.constant 0.000000e+00 : f32
    %18 = vector.broadcast %cst_22 : f32 to vector<512x128xf32>
    %19 = arith.maximumf %17, %18 : vector<512x128xf32>
    %20 = vector.shape_cast %19 : vector<512x128xf32> to vector<2x256x128xf32>
    %cst_23 = arith.constant dense<0.000000e+00> : vector<2x128xf32>
    %21 = vector.multi_reduction <add>, %20, %cst_23 [1] : vector<2x256x128xf32> to vector<2x128xf32>
    %cst_24 = arith.constant 3.906250e-03 : f32
    %22 = vector.broadcast %cst_24 : f32 to vector<2x128xf32>
    %23 = arith.mulf %21, %22 : vector<2x128xf32>
    %24 = arith.truncf %23 : vector<2x128xf32> to vector<2x128xbf16>
    %c0_25 = arith.constant 0 : index
    %c0_26 = arith.constant 0 : index
    %25 = vector.load %arg4[%c0_25, %c0_26] : memref<128x16xbf16, #tpu.memory_space<vmem>>, vector<128x16xbf16>
    %cst_27 = arith.constant dense<0.000000e+00> : vector<2x16xf32>
    %26 = tpu.matmul %24, %25, %cst_27 {dimension_numbers = #tpu.dot_dimension_numbers<[1], [0], [0], [1], [0, 0, 1, 1], [], []>} : vector<2x128xbf16>, vector<128x16xbf16>, vector<2x16xf32> -> vector<2x16xf32>
    %c0_28 = arith.constant 0 : index
    %c0_29 = arith.constant 0 : index
    %27 = vector.load %arg5[%c0_28, %c0_29] : memref<1x16xf32, #tpu.memory_space<vmem>>, vector<1x16xf32>
    %28 = vector.broadcast %27 : vector<1x16xf32> to vector<2x16xf32>
    %29 = arith.addf %26, %28 : vector<2x16xf32>
    %cst_30 = arith.constant 0.000000e+00 : f32
    %30 = vector.broadcast %cst_30 : f32 to vector<2x16xf32>
    %31 = arith.maximumf %29, %30 : vector<2x16xf32>
    %32 = arith.truncf %31 : vector<2x16xf32> to vector<2x16xbf16>
    %c0_31 = arith.constant 0 : index
    %c0_32 = arith.constant 0 : index
    %33 = vector.load %arg6[%c0_31, %c0_32] : memref<16x128xbf16, #tpu.memory_space<vmem>>, vector<16x128xbf16>
    %cst_33 = arith.constant dense<0.000000e+00> : vector<2x128xf32>
    %34 = tpu.matmul %32, %33, %cst_33 {dimension_numbers = #tpu.dot_dimension_numbers<[1], [0], [0], [1], [0, 0, 1, 1], [], []>} : vector<2x16xbf16>, vector<16x128xbf16>, vector<2x128xf32> -> vector<2x128xf32>
    %c0_34 = arith.constant 0 : index
    %c0_35 = arith.constant 0 : index
    %35 = vector.load %arg7[%c0_34, %c0_35] : memref<1x128xf32, #tpu.memory_space<vmem>>, vector<1x128xf32>
    %36 = vector.broadcast %35 : vector<1x128xf32> to vector<2x128xf32>
    %37 = arith.addf %34, %36 : vector<2x128xf32>
    %38 = arith.negf %37 : vector<2x128xf32>
    %39 = math.exp %38 : vector<2x128xf32>
    %cst_36 = arith.constant 1.000000e+00 : f32
    %40 = vector.broadcast %cst_36 : f32 to vector<2x128xf32>
    %41 = arith.addf %40, %39 : vector<2x128xf32>
    %42 = arith.divf %40, %41 : vector<2x128xf32>
    %43 = vector.shape_cast %42 : vector<2x128xf32> to vector<2x1x128xf32>
    %44 = vector.broadcast %43 : vector<2x1x128xf32> to vector<2x256x128xf32>
    %45 = arith.mulf %20, %44 : vector<2x256x128xf32>
    %46 = vector.shape_cast %45 : vector<2x256x128xf32> to vector<2x16x16x128xf32>
    %c0_37 = arith.constant 0 : index
    %c0_38 = arith.constant 0 : index
    %c0_39 = arith.constant 0 : index
    %c0_40 = arith.constant 0 : index
    %47 = vector.load %arg8[%c0_37, %c0_38, %c0_39, %c0_40] : memref<2x16x16x128xf32, #tpu.memory_space<vmem>>, vector<2x16x16x128xf32>
    tpu.vector_store %arg8[%c0_37, %c0_38, %c0_39, %c0_40], %46 {strides = array<i32>} : memref<2x16x16x128xf32, #tpu.memory_space<vmem>>, vector<2x16x16x128xf32>,
    return
  }
  func.func @transform_0(%arg0: i32) -> (i32, i32, i32, i32) {
    %c0_i32 = arith.constant 0 : i32
    %c0_i32_0 = arith.constant 0 : i32
    %c0_i32_1 = arith.constant 0 : i32
    %c0_i32_2 = arith.constant 0 : i32
    return %arg0, %c0_i32, %c0_i32_0, %c0_i32_1 : i32, i32, i32, i32
  }
  func.func @transform_1(%arg0: i32) -> (i32, i32) {
    %c0_i32 = arith.constant 0 : i32
    %c0_i32_0 = arith.constant 0 : i32
    %c0_i32_1 = arith.constant 0 : i32
    return %c0_i32, %c0_i32_0 : i32, i32
  }
  func.func @transform_2(%arg0: i32) -> (i32, i32) {
    %c0_i32 = arith.constant 0 : i32
    %c0_i32_0 = arith.constant 0 : i32
    %c0_i32_1 = arith.constant 0 : i32
    return %c0_i32, %c0_i32_0 : i32, i32
  }
  func.func @transform_3(%arg0: i32) -> (i32, i32) {
    %c0_i32 = arith.constant 0 : i32
    %c0_i32_0 = arith.constant 0 : i32
    %c0_i32_1 = arith.constant 0 : i32
    return %c0_i32, %c0_i32_0 : i32, i32
  }
  func.func @transform_4(%arg0: i32) -> (i32, i32) {
    %c0_i32 = arith.constant 0 : i32
    %c0_i32_0 = arith.constant 0 : i32
    %c0_i32_1 = arith.constant 0 : i32
    return %c0_i32, %c0_i32_0 : i32, i32
  }
  func.func @transform_5(%arg0: i32) -> (i32, i32) {
    %c0_i32 = arith.constant 0 : i32
    %c0_i32_0 = arith.constant 0 : i32
    %c0_i32_1 = arith.constant 0 : i32
    return %c0_i32, %c0_i32_0 : i32, i32
  }
  func.func @transform_6(%arg0: i32) -> (i32, i32) {
    %c0_i32 = arith.constant 0 : i32
    %c0_i32_0 = arith.constant 0 : i32
    %c0_i32_1 = arith.constant 0 : i32
    return %c0_i32, %c0_i32_0 : i32, i32
  }
  func.func @transform_7(%arg0: i32) -> (i32, i32, i32, i32) {
    %c0_i32 = arith.constant 0 : i32
    %c0_i32_0 = arith.constant 0 : i32
    %c0_i32_1 = arith.constant 0 : i32
    %c0_i32_2 = arith.constant 0 : i32
    return %arg0, %c0_i32, %c0_i32_0, %c0_i32_1 : i32, i32, i32, i32
  }
}

</mosaic_0001>

<llo_original>
// kernel: sspcab_forward.1
$region0: #{sspcab_forward.1}
  #allocation0 [shape = 'u32[]', space=smem, size = 0x4, offset = 0x4, fixed_abs, tag = 'smem constant byte address 0x4 - core index']
  #allocation1 [shape = 'u32[144,128]{1,0:T(1,128)}', space=vmem, size = 0x12000, scoped, tag = 'internal scratch']
  #allocation2 [shape = 'bf16[2,20,24,128]{3,2,1,0:T(8,128)(2,1)}', space=vmem, size = 0x3c000, scoped, tag = 'scratch operand']
  %s0 = inlined_call_operand.vmem [shape: f32[2,16,16,128], index: 0, kind: input, shape index: {}]
  %s1 = inlined_call_operand.vmem [shape: bf16[512,128], index: 1, kind: input, shape index: {}]
  %s2 = inlined_call_operand.vmem [shape: f32[1,128], index: 2, kind: input, shape index: {}]
  %s3 = inlined_call_operand.vmem [shape: bf16[128,16], index: 3, kind: input, shape index: {}]
  %s4 = inlined_call_operand.vmem [shape: f32[1,16], index: 4, kind: input, shape index: {}]
  %s5 = inlined_call_operand.vmem [shape: bf16[16,128], index: 5, kind: input, shape index: {}]
  %s6 = inlined_call_operand.vmem [shape: f32[1,128], index: 6, kind: input, shape index: {}]
  %s7 = inlined_call_operand.hbm [shape: f32[2,16,16,128], index: 7, kind: output, shape index: {}]
  %s8 = sld [smem:[#allocation0]]
  $region38: #{sspcab_forward.1} parent=0
    _
  %s10 = ssub.s32 1, %s8
  %s11 = scalar_select 0, %s10, %s8
  $region1: #{sspcab_forward.1} parent=0
    #allocation3 [shape = 'u8[262144]{0}', space=vmem, size = 0x40000, scoped, tag = 'output window, operand 0, single buffered']
    #allocation4 [shape = 's32[1]{0}', space=sflag, size = 0x4, scoped, tag = 'scoped memory for sspcab_forward.1']
    %12 = vsyncpa [#allocation4], 0
    // Predicated region
    $region2: #{sspcab_forward.1} parent=1 // pred_check
      _
    $region3: #{sspcab_forward.1} parent=1 // pred_check_branch
      %14 = sbr.rel (0) target = $region5
    $region4: #{sspcab_forward.1} parent=1 // pred_region
      _
    $region5: #{sspcab_forward.1} parent=1 // pred_fallthru
      _
    // Predicated region
    $region6: #{sspcab_forward.1} parent=1 // pred_check
      _
    $region7: #{sspcab_forward.1} parent=1 // pred_check_branch
      %16 = sbr.rel (0) target = $region9
    $region8: #{sspcab_forward.1} parent=1 // pred_region
      _
    $region9: #{sspcab_forward.1} parent=1 // pred_fallthru
      _
    // Predicated region
    $region10: #{sspcab_forward.1} parent=1 // pred_check
      _
    $region11: #{sspcab_forward.1} parent=1 // pred_check_branch
      %18 = sbr.rel (0) target = $region13
    $region12: #{sspcab_forward.1} parent=1 // pred_region
      _
    $region13: #{sspcab_forward.1} parent=1 // pred_fallthru
      _
    // Predicated region
    $region14: #{sspcab_forward.1} parent=1 // pred_check
      _
    $region15: #{sspcab_forward.1} parent=1 // pred_check_branch
      %20 = sbr.rel (0) target = $region17
    $region16: #{sspcab_forward.1} parent=1 // pred_region
      _
    $region17: #{sspcab_forward.1} parent=1 // pred_fallthru
      _
    // Predicated region
    $region18: #{sspcab_forward.1} parent=1 // pred_check
      _
    $region19: #{sspcab_forward.1} parent=1 // pred_check_branch
      %22 = sbr.rel (0) target = $region21
    $region20: #{sspcab_forward.1} parent=1 // pred_region
      _
    $region21: #{sspcab_forward.1} parent=1 // pred_fallthru
      _
    // Predicated region
    $region22: #{sspcab_forward.1} parent=1 // pred_check
      _
    $region23: #{sspcab_forward.1} parent=1 // pred_check_branch
      %24 = sbr.rel (0) target = $region25
    $region24: #{sspcab_forward.1} parent=1 // pred_region
      _
    $region25: #{sspcab_forward.1} parent=1 // pred_fallthru
      _
    // Predicated region
    $region26: #{sspcab_forward.1} parent=1 // pred_check
      _
    $region27: #{sspcab_forward.1} parent=1 // pred_check_branch
      %26 = sbr.rel (0) target = $region29
    $region28: #{sspcab_forward.1} parent=1 // pred_region
      _
    $region29: #{sspcab_forward.1} parent=1 // pred_fallthru
      _
    %28 = vst [vmem:[#allocation2] sm:$0xf] 0
    %29 = vst [vmem:[#allocation2 + $0x4] sm:$0xf] 0
    %30 = vst [vmem:[#allocation2 + $0x8] sm:$0xf] 0
    %31 = vst [vmem:[#allocation2 + $0xc] sm:$0xf] 0
    %32 = vst [vmem:[#allocation2 + $0x10] sm:$0xf] 0
    %33 = vst [vmem:[#allocation2 + $0x14] sm:$0xf] 0
    %34 = vst [vmem:[#allocation2 + $0x18] sm:$0xf] 0
    %35 = vst [vmem:[#allocation2 + $0x1c] sm:$0xf] 0
    %36 = vst [vmem:[#allocation2 + $0x20] sm:$0xf] 0
    %37 = vst [vmem:[#allocation2 + $0x24] sm:$0xf] 0
    %38 = vst [vmem:[#allocation2 + $0x28] sm:$0xf] 0
    %39 = vst [vmem:[#allocation2 + $0x2c] sm:$0xf] 0
    %40 = vst [vmem:[#allocation2 + $0x30] sm:$0xf] 0
    %41 = vst [vmem:[#allocation2 + $0x34] sm:$0xf] 0
    %42 = vst [vmem:[#allocation2 + $0x38] sm:$0xf] 0
    %43 = vst [vmem:[#allocation2 + $0x3c] sm:$0xf] 0
    %44 = vst [vmem:[#allocation2 + $0x40] sm:$0xf] 0
    %45 = vst [vmem:[#allocation2 + $0x44] sm:$0xf] 0
    %46 = vst [vmem:[#allocation2 + $0x48] sm:$0xf] 0
    %47 = vst [vmem:[#allocation2 + $0x4c] sm:$0xf] 0
    %48 = vst [vmem:[#allocation2 + $0x50] sm:$0xf] 0
    %49 = vst [vmem:[#allocation2 + $0x54] sm:$0xf] 0
    %50 = vst [vmem:[#allocation2 + $0x58] sm:$0xf] 0
    %51 = vst [vmem:[#allocation2 + $0x5c] sm:$0xf] 0
    %52 = vst [vmem:[#allocation2 + $0x60] sm:$0xf] 0
    %53 = vst [vmem:[#allocation2 + $0x64] sm:$0xf] 0
    %54 = vst [vmem:[#allocation2 + $0x68] sm:$0xf] 0
    %55 = vst [vmem:[#allocation2 + $0x6c] sm:$0xf] 0
    %56 = vst [vmem:[#allocation2 + $0x70] sm:$0xf] 0
    %57 = vst [vmem:[#allocation2 + $0x74] sm:$0xf] 0
    %58 = vst [vmem:[#allocation2 + $0x78] sm:$0xf] 0
    %59 = vst [vmem:[#allocation2 + $0x7c] sm:$0xf] 0
    %60 = vst [vmem:[#allocation2 + $0x80] sm:$0xf] 0
    %61 = vst [vmem:[#allocation2 + $0x84] sm:$0xf] 0
    %62 = vst [vmem:[#allocation2 + $0x88] sm:$0xf] 0
    %63 = vst [vmem:[#allocation2 + $0x8c] sm:$0xf] 0
    %64 = vst [vmem:[#allocation2 + $0x90] sm:$0xf] 0
    %65 = vst [vmem:[#allocation2 + $0x94] sm:$0xf] 0
    %66 = vst [vmem:[#allocation2 + $0x98] sm:$0xf] 0
    %67 = vst [vmem:[#allocation2 + $0x9c] sm:$0xf] 0
    %68 = vst [vmem:[#allocation2 + $0xa0] sm:$0xf] 0
    %69 = vst [vmem:[#allocation2 + $0xa4] sm:$0xf] 0
    %70 = vst [vmem:[#allocation2 + $0xa8] sm:$0xf] 0
    %71 = vst [vmem:[#allocation2 + $0xac] sm:$0xf] 0
    %72 = vst [vmem:[#allocation2 + $0xb0] sm:$0xf] 0
    %73 = vst [vmem:[#allocation2 + $0xb4] sm:$0xf] 0
    %74 = vst [vmem:[#allocation2 + $0xb8] sm:$0xf] 0
    %75 = vst [vmem:[#allocation2 + $0xbc] sm:$0xf] 0
    %76 = vst [vmem:[#allocation2 + $0xc0] sm:$0xf] 0
    %77 = vst [vmem:[#allocation2 + $0xc4] sm:$0xf] 0
    %78 = vst [vmem:[#allocation2 + $0xc8] sm:$0xf] 0
    %79 = vst [vmem:[#allocation2 + $0xcc] sm:$0xf] 0
    %80 = vst [vmem:[#allocation2 + $0xd0] sm:$0xf] 0
    %81 = vst [vmem:[#allocation2 + $0xd4] sm:$0xf] 0
    %82 = vst [vmem:[#allocation2 + $0xd8] sm:$0xf] 0
    %83 = vst [vmem:[#allocation2 + $0xdc] sm:$0xf] 0
    %84 = vst [vmem:[#allocation2 + $0xe0] sm:$0xf] 0
    %85 = vst [vmem:[#allocation2 + $0xe4] sm:$0xf] 0
    %86 = vst [vmem:[#allocation2 + $0xe8] sm:$0xf] 0
    %87 = vst [vmem:[#allocation2 + $0xec] sm:$0xf] 0
    %88 = vst [vmem:[#allocation2 + $0xf0] sm:$0xf] 0
    %89 = vst [vmem:[#allocation2 + $0xf4] sm:$0xf] 0
    %90 = vst [vmem:[#allocation2 + $0xf8] sm:$0xf] 0
    %91 = vst [vmem:[#allocation2 + $0xfc] sm:$0xf] 0
    %92 = vst [vmem:[#allocation2 + $0x100] sm:$0xf] 0
    %93 = vst [vmem:[#allocation2 + $0x104] sm:$0xf] 0
    %94 = vst [vmem:[#allocation2 + $0x108] sm:$0xf] 0
    %95 = vst [vmem:[#allocation2 + $0x10c] sm:$0xf] 0
    %96 = vst [vmem:[#allocation2 + $0x110] sm:$0xf] 0
    %97 = vst [vmem:[#allocation2 + $0x114] sm:$0xf] 0
    %98 = vst [vmem:[#allocation2 + $0x118] sm:$0xf] 0
    %99 = vst [vmem:[#allocation2 + $0x11c] sm:$0xf] 0
    %100 = vst [vmem:[#allocation2 + $0x120] sm:$0xf] 0
    %101 = vst [vmem:[#allocation2 + $0x124] sm:$0xf] 0
    %102 = vst [vmem:[#allocation2 + $0x128] sm:$0xf] 0
    %103 = vst [vmem:[#allocation2 + $0x12c] sm:$0xf] 0
    %104 = vst [vmem:[#allocation2 + $0x130] sm:$0xf] 0
    %105 = vst [vmem:[#allocation2 + $0x134] sm:$0xf] 0
    %106 = vst [vmem:[#allocation2 + $0x138] sm:$0xf] 0
    %107 = vst [vmem:[#allocation2 + $0x13c] sm:$0xf] 0
    %108 = vst [vmem:[#allocation2 + $0x140] sm:$0xf] 0
    %109 = vst [vmem:[#allocation2 + $0x144] sm:$0xf] 0
    %110 = vst [vmem:[#allocation2 + $0x148] sm:$0xf] 0
    %111 = vst [vmem:[#allocation2 + $0x14c] sm:$0xf] 0
    %112 = vst [vmem:[#allocation2 + $0x150] sm:$0xf] 0
    %113 = vst [vmem:[#allocation2 + $0x154] sm:$0xf] 0
    %114 = vst [vmem:[#allocation2 + $0x158] sm:$0xf] 0
    %115 = vst [vmem:[#allocation2 + $0x15c] sm:$0xf] 0
    %116 = vst [vmem:[#allocation2 + $0x160] sm:$0xf] 0
    %117 = vst [vmem:[#allocation2 + $0x164] sm:$0xf] 0
    %118 = vst [vmem:[#allocation2 + $0x168] sm:$0xf] 0
    %119 = vst [vmem:[#allocation2 + $0x16c] sm:$0xf] 0
    %120 = vst [vmem:[#allocation2 + $0x170] sm:$0xf] 0
    %121 = vst [vmem:[#allocation2 + $0x174] sm:$0xf] 0
    %122 = vst [vmem:[#allocation2 + $0x178] sm:$0xf] 0
    %123 = vst [vmem:[#allocation2 + $0x17c] sm:$0xf] 0
    %124 = vst [vmem:[#allocation2 + $0x180] sm:$0xf] 0
    %125 = vst [vmem:[#allocation2 + $0x184] sm:$0xf] 0
    %126 = vst [vmem:[#allocation2 + $0x188] sm:$0xf] 0
    %127 = vst [vmem:[#allocation2 + $0x18c] sm:$0xf] 0
    %128 = vst [vmem:[#allocation2 + $0x190] sm:$0xf] 0
    %129 = vst [vmem:[#allocation2 + $0x194] sm:$0xf] 0
    %130 = vst [vmem:[#allocation2 + $0x198] sm:$0xf] 0
    %131 = vst [vmem:[#allocation2 + $0x19c] sm:$0xf] 0
    %132 = vst [vmem:[#allocation2 + $0x1a0] sm:$0xf] 0
    %133 = vst [vmem:[#allocation2 + $0x1a4] sm:$0xf] 0
    %134 = vst [vmem:[#allocation2 + $0x1a8] sm:$0xf] 0
    %135 = vst [vmem:[#allocation2 + $0x1ac] sm:$0xf] 0
    %136 = vst [vmem:[#allocation2 + $0x1b0] sm:$0xf] 0
    %137 = vst [vmem:[#allocation2 + $0x1b4] sm:$0xf] 0
    %138 = vst [vmem:[#allocation2 + $0x1b8] sm:$0xf] 0
    %139 = vst [vmem:[#allocation2 + $0x1bc] sm:$0xf] 0
    %140 = vst [vmem:[#allocation2 + $0x1c0] sm:$0xf] 0
    %141 = vst [vmem:[#allocation2 + $0x1c4] sm:$0xf] 0
    %142 = vst [vmem:[#allocation2 + $0x1c8] sm:$0xf] 0
    %143 = vst [vmem:[#allocation2 + $0x1cc] sm:$0xf] 0
    %144 = vst [vmem:[#allocation2 + $0x1d0] sm:$0xf] 0
    %145 = vst [vmem:[#allocation2 + $0x1d4] sm:$0xf] 0
    %146 = vst [vmem:[#allocation2 + $0x1d8] sm:$0xf] 0
    %147 = vst [vmem:[#allocation2 + $0x1dc] sm:$0xf] 0
    %v148 = vld [vmem:[%s0] sm:$0xff]
    %v149 = vld [vmem:[%s0 + $0x8] sm:$0xff]
    %v150 = vld [vmem:[%s0 + $0x10] sm:$0xff]
    %v151 = vld [vmem:[%s0 + $0x18] sm:$0xff]
    %v152 = vld [vmem:[%s0 + $0x20] sm:$0xff]
    %v153 = vld [vmem:[%s0 + $0x28] sm:$0xff]
    %v154 = vld [vmem:[%s0 + $0x30] sm:$0xff]
    %v155 = vld [vmem:[%s0 + $0x38] sm:$0xff]
    %v156 = vld [vmem:[%s0 + $0x40] sm:$0xff]
    %v157 = vld [vmem:[%s0 + $0x48] sm:$0xff]
    %v158 = vld [vmem:[%s0 + $0x50] sm:$0xff]
    %v159 = vld [vmem:[%s0 + $0x58] sm:$0xff]
    %v160 = vld [vmem:[%s0 + $0x60] sm:$0xff]
    %v161 = vld [vmem:[%s0 + $0x68] sm:$0xff]
    %v162 = vld [vmem:[%s0 + $0x70] sm:$0xff]
    %v163 = vld [vmem:[%s0 + $0x78] sm:$0xff]
    %v164 = vld [vmem:[%s0 + $0x80] sm:$0xff]
    %v165 = vld [vmem:[%s0 + $0x88] sm:$0xff]
    %v166 = vld [vmem:[%s0 + $0x90] sm:$0xff]
    %v167 = vld [vmem:[%s0 + $0x98] sm:$0xff]
    %v168 = vld [vmem:[%s0 + $0xa0] sm:$0xff]
    %v169 = vld [vmem:[%s0 + $0xa8] sm:$0xff]
    %v170 = vld [vmem:[%s0 + $0xb0] sm:$0xff]
    %v171 = vld [vmem:[%s0 + $0xb8] sm:$0xff]
    %v172 = vld [vmem:[%s0 + $0xc0] sm:$0xff]
    %v173 = vld [vmem:[%s0 + $0xc8] sm:$0xff]
    %v174 = vld [vmem:[%s0 + $0xd0] sm:$0xff]
    %v175 = vld [vmem:[%s0 + $0xd8] sm:$0xff]
    %v176 = vld [vmem:[%s0 + $0xe0] sm:$0xff]
    %v177 = vld [vmem:[%s0 + $0xe8] sm:$0xff]
    %v178 = vld [vmem:[%s0 + $0xf0] sm:$0xff]
    %v179 = vld [vmem:[%s0 + $0xf8] sm:$0xff]
    %v180 = vld [vmem:[%s0 + $0x100] sm:$0xff]
    %v181 = vld [vmem:[%s0 + $0x108] sm:$0xff]
    %v182 = vld [vmem:[%s0 + $0x110] sm:$0xff]
    %v183 = vld [vmem:[%s0 + $0x118] sm:$0xff]
    %v184 = vld [vmem:[%s0 + $0x120] sm:$0xff]
    %v185 = vld [vmem:[%s0 + $0x128] sm:$0xff]
    %v186 = vld [vmem:[%s0 + $0x130] sm:$0xff]
    %v187 = vld [vmem:[%s0 + $0x138] sm:$0xff]
    %v188 = vld [vmem:[%s0 + $0x140] sm:$0xff]
    %v189 = vld [vmem:[%s0 + $0x148] sm:$0xff]
    %v190 = vld [vmem:[%s0 + $0x150] sm:$0xff]
    %v191 = vld [vmem:[%s0 + $0x158] sm:$0xff]
    %v192 = vld [vmem:[%s0 + $0x160] sm:$0xff]
    %v193 = vld [vmem:[%s0 + $0x168] sm:$0xff]
    %v194 = vld [vmem:[%s0 + $0x170] sm:$0xff]
    %v195 = vld [vmem:[%s0 + $0x178] sm:$0xff]
    %v196 = vld [vmem:[%s0 + $0x180] sm:$0xff]
    %v197 = vld [vmem:[%s0 + $0x188] sm:$0xff]
    %v198 = vld [vmem:[%s0 + $0x190] sm:$0xff]
    %v199 = vld [vmem:[%s0 + $0x198] sm:$0xff]
    %v200 = vld [vmem:[%s0 + $0x1a0] sm:$0xff]
    %v201 = vld [vmem:[%s0 + $0x1a8] sm:$0xff]
    %v202 = vld [vmem:[%s0 + $0x1b0] sm:$0xff]
    %v203 = vld [vmem:[%s0 + $0x1b8] sm:$0xff]
    %v204 = vld [vmem:[%s0 + $0x1c0] sm:$0xff]
    %v205 = vld [vmem:[%s0 + $0x1c8] sm:$0xff]
    %v206 = vld [vmem:[%s0 + $0x1d0] sm:$0xff]
    %v207 = vld [vmem:[%s0 + $0x1d8] sm:$0xff]
    %v208 = vld [vmem:[%s0 + $0x1e0] sm:$0xff]
    %v209 = vld [vmem:[%s0 + $0x1e8] sm:$0xff]
    %v210 = vld [vmem:[%s0 + $0x1f0] sm:$0xff]
    %v211 = vld [vmem:[%s0 + $0x1f8] sm:$0xff]
    %v212 = vpack.c.bf16 %v149, %v148
    %v213 = vpack.c.bf16 %v151, %v150
    %v214 = vpack.c.bf16 %v153, %v152
    %v215 = vpack.c.bf16 %v155, %v154
    %v216 = vpack.c.bf16 %v157, %v156
    %v217 = vpack.c.bf16 %v159, %v158
    %v218 = vpack.c.bf16 %v161, %v160
    %v219 = vpack.c.bf16 %v163, %v162
    %v220 = vpack.c.bf16 %v165, %v164
    %v221 = vpack.c.bf16 %v167, %v166
    %v222 = vpack.c.bf16 %v169, %v168
    %v223 = vpack.c.bf16 %v171, %v170
    %v224 = vpack.c.bf16 %v173, %v172
    %v225 = vpack.c.bf16 %v175, %v174
    %v226 = vpack.c.bf16 %v177, %v176
    %v227 = vpack.c.bf16 %v179, %v178
    %v228 = vpack.c.bf16 %v181, %v180
    %v229 = vpack.c.bf16 %v183, %v182
    %v230 = vpack.c.bf16 %v185, %v184
    %v231 = vpack.c.bf16 %v187, %v186
    %v232 = vpack.c.bf16 %v189, %v188
    %v233 = vpack.c.bf16 %v191, %v190
    %v234 = vpack.c.bf16 %v193, %v192
    %v235 = vpack.c.bf16 %v195, %v194
    %v236 = vpack.c.bf16 %v197, %v196
    %v237 = vpack.c.bf16 %v199, %v198
    %v238 = vpack.c.bf16 %v201, %v200
    %v239 = vpack.c.bf16 %v203, %v202
    %v240 = vpack.c.bf16 %v205, %v204
    %v241 = vpack.c.bf16 %v207, %v206
    %v242 = vpack.c.bf16 %v209, %v208
    %v243 = vpack.c.bf16 %v211, %v210
    %v276 = vunpack.c.l.b16 %v212
    %v277 = vunpack.c.h.b16 %v212
    %v278 = vunpack.c.l.b16 %v213
    %v279 = vunpack.c.h.b16 %v213
    %v280 = vunpack.c.l.b16 %v214
    %v281 = vunpack.c.h.b16 %v214
    %v282 = vunpack.c.l.b16 %v215
    %v283 = vunpack.c.h.b16 %v215
    %v284 = vunpack.c.l.b16 %v216
    %v285 = vunpack.c.h.b16 %v216
    %v286 = vunpack.c.l.b16 %v217
    %v287 = vunpack.c.h.b16 %v217
    %v288 = vunpack.c.l.b16 %v218
    %v289 = vunpack.c.h.b16 %v218
    %v290 = vunpack.c.l.b16 %v219
    %v291 = vunpack.c.h.b16 %v219
    %v292 = vunpack.c.l.b16 %v220
    %v293 = vunpack.c.h.b16 %v220
    %v294 = vunpack.c.l.b16 %v221
    %v295 = vunpack.c.h.b16 %v221
    %v296 = vunpack.c.l.b16 %v222
    %v297 = vunpack.c.h.b16 %v222
    %v298 = vunpack.c.l.b16 %v223
    %v299 = vunpack.c.h.b16 %v223
    %v300 = vunpack.c.l.b16 %v224
    %v301 = vunpack.c.h.b16 %v224
    %v302 = vunpack.c.l.b16 %v225
    %v303 = vunpack.c.h.b16 %v225
    %v304 = vunpack.c.l.b16 %v226
    %v305 = vunpack.c.h.b16 %v226
    %v306 = vunpack.c.l.b16 %v227
    %v307 = vunpack.c.h.b16 %v227
    %v308 = vunpack.c.l.b16 %v228
    %v309 = vunpack.c.h.b16 %v228
    %v310 = vunpack.c.l.b16 %v229
    %v311 = vunpack.c.h.b16 %v229
    %v312 = vunpack.c.l.b16 %v230
    %v313 = vunpack.c.h.b16 %v230
    %v314 = vunpack.c.l.b16 %v231
    %v315 = vunpack.c.h.b16 %v231
    %v316 = vunpack.c.l.b16 %v232
    %v317 = vunpack.c.h.b16 %v232
    %v318 = vunpack.c.l.b16 %v233
    %v319 = vunpack.c.h.b16 %v233
    %v320 = vunpack.c.l.b16 %v234
    %v321 = vunpack.c.h.b16 %v234
    %v322 = vunpack.c.l.b16 %v235
    %v323 = vunpack.c.h.b16 %v235
    %v324 = vunpack.c.l.b16 %v236
    %v325 = vunpack.c.h.b16 %v236
    %v326 = vunpack.c.l.b16 %v237
    %v327 = vunpack.c.h.b16 %v237
    %v328 = vunpack.c.l.b16 %v238
    %v329 = vunpack.c.h.b16 %v238
    %v330 = vunpack.c.l.b16 %v239
    %v331 = vunpack.c.h.b16 %v239
    %v332 = vunpack.c.l.b16 %v240
    %v333 = vunpack.c.h.b16 %v240
    %v334 = vunpack.c.l.b16 %v241
    %v335 = vunpack.c.h.b16 %v241
    %v336 = vunpack.c.l.b16 %v242
    %v337 = vunpack.c.h.b16 %v242
    %v338 = vunpack.c.l.b16 %v243
    %v339 = vunpack.c.h.b16 %v243
    %v340 = vpack.c.b16 %v276, %v276
    %v341 = vpack.c.b16 %v277, %v277
    %v342 = vpack.c.b16 %v278, %v278
    %v343 = vpack.c.b16 %v279, %v279
    %v344 = vpack.c.b16 %v280, %v280
    %v345 = vpack.c.b16 %v281, %v281
    %v346 = vpack.c.b16 %v282, %v282
    %v347 = vpack.c.b16 %v283, %v283
    %v348 = vpack.c.b16 %v284, %v284
    %v349 = vpack.c.b16 %v285, %v285
    %v350 = vpack.c.b16 %v286, %v286
    %v351 = vpack.c.b16 %v287, %v287
    %v352 = vpack.c.b16 %v288, %v288
    %v353 = vpack.c.b16 %v289, %v289
    %v354 = vpack.c.b16 %v290, %v290
    %v355 = vpack.c.b16 %v291, %v291
    %v356 = vpack.c.b16 %v292, %v292
    %v357 = vpack.c.b16 %v293, %v293
    %v358 = vpack.c.b16 %v294, %v294
    %v359 = vpack.c.b16 %v295, %v295
    %v360 = vpack.c.b16 %v296, %v296
    %v361 = vpack.c.b16 %v297, %v297
    %v362 = vpack.c.b16 %v298, %v298
    %v363 = vpack.c.b16 %v299, %v299
    %v364 = vpack.c.b16 %v300, %v300
    %v365 = vpack.c.b16 %v301, %v301
    %v366 = vpack.c.b16 %v302, %v302
    %v367 = vpack.c.b16 %v303, %v303
    %v368 = vpack.c.b16 %v304, %v304
    %v369 = vpack.c.b16 %v305, %v305
    %v370 = vpack.c.b16 %v306, %v306
    %v371 = vpack.c.b16 %v307, %v307
    %v372 = vpack.c.b16 %v308, %v308
    %v373 = vpack.c.b16 %v309, %v309
    %v374 = vpack.c.b16 %v310, %v310
    %v375 = vpack.c.b16 %v311, %v311
    %v376 = vpack.c.b16 %v312, %v312
    %v377 = vpack.c.b16 %v313, %v313
    %v378 = vpack.c.b16 %v314, %v314
    %v379 = vpack.c.b16 %v315, %v315
    %v380 = vpack.c.b16 %v316, %v316
    %v381 = vpack.c.b16 %v317, %v317
    %v382 = vpack.c.b16 %v318, %v318
    %v383 = vpack.c.b16 %v319, %v319
    %v384 = vpack.c.b16 %v320, %v320
    %v385 = vpack.c.b16 %v321, %v321
    %v386 = vpack.c.b16 %v322, %v322
    %v387 = vpack.c.b16 %v323, %v323
    %v388 = vpack.c.b16 %v324, %v324
    %v389 = vpack.c.b16 %v325, %v325
    %v390 = vpack.c.b16 %v326, %v326
    %v391 = vpack.c.b16 %v327, %v327
    %v392 = vpack.c.b16 %v328, %v328
    %v393 = vpack.c.b16 %v329, %v329
    %v394 = vpack.c.b16 %v330, %v330
    %v395 = vpack.c.b16 %v331, %v331
    %v396 = vpack.c.b16 %v332, %v332
    %v397 = vpack.c.b16 %v333, %v333
    %v398 = vpack.c.b16 %v334, %v334
    %v399 = vpack.c.b16 %v335, %v335
    %v400 = vpack.c.b16 %v336, %v336
    %v401 = vpack.c.b16 %v337, %v337
    %v402 = vpack.c.b16 %v338, %v338
    %v403 = vpack.c.b16 %v339, %v339
    %vm404 = vcmask 1040384
    %vm405 = vcmask 1044484
    %vm406 = vmor %vm404, %vm405
    %v407 = vrot.slane %v340, 7
    %v408 = vrot.slane %v407, 4
    %v409 = vrot.slane %v341, 7
    %v410 = vsel %vm406, %v408, %v409
    %v411 = vrot.slane %v409, 4
    %v412 = vrot.slane %v342, 7
    %v413 = vrot.slane %v412, 4
    %v414 = vrot.slane %v343, 7
    %v415 = vsel %vm406, %v413, %v414
    %v416 = vrot.slane %v414, 4
    %v417 = vrot.slane %v344, 7
    %v418 = vrot.slane %v417, 4
    %v419 = vrot.slane %v345, 7
    %v420 = vsel %vm406, %v418, %v419
    %v421 = vrot.slane %v419, 4
    %v422 = vrot.slane %v346, 7
    %v423 = vrot.slane %v422, 4
    %v424 = vrot.slane %v347, 7
    %v425 = vsel %vm406, %v423, %v424
    %v426 = vrot.slane %v424, 4
    %v427 = vrot.slane %v348, 7
    %v428 = vrot.slane %v427, 4
    %v429 = vrot.slane %v349, 7
    %v430 = vsel %vm406, %v428, %v429
    %v431 = vrot.slane %v429, 4
    %v432 = vrot.slane %v350, 7
    %v433 = vrot.slane %v432, 4
    %v434 = vrot.slane %v351, 7
    %v435 = vsel %vm406, %v433, %v434
    %v436 = vrot.slane %v434, 4
    %v437 = vrot.slane %v352, 7
    %v438 = vrot.slane %v437, 4
    %v439 = vrot.slane %v353, 7
    %v440 = vsel %vm406, %v438, %v439
    %v441 = vrot.slane %v439, 4
    %v442 = vrot.slane %v354, 7
    %v443 = vrot.slane %v442, 4
    %v444 = vrot.slane %v355, 7
    %v445 = vsel %vm406, %v443, %v444
    %v446 = vrot.slane %v444, 4
    %v447 = vrot.slane %v356, 7
    %v448 = vrot.slane %v447, 4
    %v449 = vrot.slane %v357, 7
    %v450 = vsel %vm406, %v448, %v449
    %v451 = vrot.slane %v449, 4
    %v452 = vrot.slane %v358, 7
    %v453 = vrot.slane %v452, 4
    %v454 = vrot.slane %v359, 7
    %v455 = vsel %vm406, %v453, %v454
    %v456 = vrot.slane %v454, 4
    %v457 = vrot.slane %v360, 7
    %v458 = vrot.slane %v457, 4
    %v459 = vrot.slane %v361, 7
    %v460 = vsel %vm406, %v458, %v459
    %v461 = vrot.slane %v459, 4
    %v462 = vrot.slane %v362, 7
    %v463 = vrot.slane %v462, 4
    %v464 = vrot.slane %v363, 7
    %v465 = vsel %vm406, %v463, %v464
    %v466 = vrot.slane %v464, 4
    %v467 = vrot.slane %v364, 7
    %v468 = vrot.slane %v467, 4
    %v469 = vrot.slane %v365, 7
    %v470 = vsel %vm406, %v468, %v469
    %v471 = vrot.slane %v469, 4
    %v472 = vrot.slane %v366, 7
    %v473 = vrot.slane %v472, 4
    %v474 = vrot.slane %v367, 7
    %v475 = vsel %vm406, %v473, %v474
    %v476 = vrot.slane %v474, 4
    %v477 = vrot.slane %v368, 7
    %v478 = vrot.slane %v477, 4
    %v479 = vrot.slane %v369, 7
    %v480 = vsel %vm406, %v478, %v479
    %v481 = vrot.slane %v479, 4
    %v482 = vrot.slane %v370, 7
    %v483 = vrot.slane %v482, 4
    %v484 = vrot.slane %v371, 7
    %v485 = vsel %vm406, %v483, %v484
    %v486 = vrot.slane %v484, 4
    %v487 = vrot.slane %v372, 7
    %v488 = vrot.slane %v487, 4
    %v489 = vrot.slane %v373, 7
    %v490 = vsel %vm406, %v488, %v489
    %v491 = vrot.slane %v489, 4
    %v492 = vrot.slane %v374, 7
    %v493 = vrot.slane %v492, 4
    %v494 = vrot.slane %v375, 7
    %v495 = vsel %vm406, %v493, %v494
    %v496 = vrot.slane %v494, 4
    %v497 = vrot.slane %v376, 7
    %v498 = vrot.slane %v497, 4
    %v499 = vrot.slane %v377, 7
    %v500 = vsel %vm406, %v498, %v499
    %v501 = vrot.slane %v499, 4
    %v502 = vrot.slane %v378, 7
    %v503 = vrot.slane %v502, 4
    %v504 = vrot.slane %v379, 7
    %v505 = vsel %vm406, %v503, %v504
    %v506 = vrot.slane %v504, 4
    %v507 = vrot.slane %v380, 7
    %v508 = vrot.slane %v507, 4
    %v509 = vrot.slane %v381, 7
    %v510 = vsel %vm406, %v508, %v509
    %v511 = vrot.slane %v509, 4
    %v512 = vrot.slane %v382, 7
    %v513 = vrot.slane %v512, 4
    %v514 = vrot.slane %v383, 7
    %v515 = vsel %vm406, %v513, %v514
    %v516 = vrot.slane %v514, 4
    %v517 = vrot.slane %v384, 7
    %v518 = vrot.slane %v517, 4
    %v519 = vrot.slane %v385, 7
    %v520 = vsel %vm406, %v518, %v519
    %v521 = vrot.slane %v519, 4
    %v522 = vrot.slane %v386, 7
    %v523 = vrot.slane %v522, 4
    %v524 = vrot.slane %v387, 7
    %v525 = vsel %vm406, %v523, %v524
    %v526 = vrot.slane %v524, 4
    %v527 = vrot.slane %v388, 7
    %v528 = vrot.slane %v527, 4
    %v529 = vrot.slane %v389, 7
    %v530 = vsel %vm406, %v528, %v529
    %v531 = vrot.slane %v529, 4
    %v532 = vrot.slane %v390, 7
    %v533 = vrot.slane %v532, 4
    %v534 = vrot.slane %v391, 7
    %v535 = vsel %vm406, %v533, %v534
    %v536 = vrot.slane %v534, 4
    %v537 = vrot.slane %v392, 7
    %v538 = vrot.slane %v537, 4
    %v539 = vrot.slane %v393, 7
    %v540 = vsel %vm406, %v538, %v539
    %v541 = vrot.slane %v539, 4
    %v542 = vrot.slane %v394, 7
    %v543 = vrot.slane %v542, 4
    %v544 = vrot.slane %v395, 7
    %v545 = vsel %vm406, %v543, %v544
    %v546 = vrot.slane %v544, 4
    %v547 = vrot.slane %v396, 7
    %v548 = vrot.slane %v547, 4
    %v549 = vrot.slane %v397, 7
    %v550 = vsel %vm406, %v548, %v549
    %v551 = vrot.slane %v549, 4
    %v552 = vrot.slane %v398, 7
    %v553 = vrot.slane %v552, 4
    %v554 = vrot.slane %v399, 7
    %v555 = vsel %vm406, %v553, %v554
    %v556 = vrot.slane %v554, 4
    %v557 = vrot.slane %v400, 7
    %v558 = vrot.slane %v557, 4
    %v559 = vrot.slane %v401, 7
    %v560 = vsel %vm406, %v558, %v559
    %v561 = vrot.slane %v559, 4
    %v562 = vrot.slane %v402, 7
    %v563 = vrot.slane %v562, 4
    %v564 = vrot.slane %v403, 7
    %v565 = vsel %vm406, %v563, %v564
    %v566 = vrot.slane %v564, 4
    %s663 = scalar_lea.vmem [#allocation2], 24
    %664 = vst [vmem:[%s663] sm:$0xe] %v407
    %665 = vst [vmem:[%s663 + $0x4] sm:$0xf] %v410
    %666 = vst [vmem:[%s663 + $0x8] sm:$0x1] %v411
    %667 = vst [vmem:[%s663 + $0xc] sm:$0xe] %v412
    %668 = vst [vmem:[%s663 + $0x10] sm:$0xf] %v415
    %669 = vst [vmem:[%s663 + $0x14] sm:$0x1] %v416
    %670 = vst [vmem:[%s663 + $0x18] sm:$0xe] %v417
    %671 = vst [vmem:[%s663 + $0x1c] sm:$0xf] %v420
    %672 = vst [vmem:[%s663 + $0x20] sm:$0x1] %v421
    %673 = vst [vmem:[%s663 + $0x24] sm:$0xe] %v422
    %674 = vst [vmem:[%s663 + $0x28] sm:$0xf] %v425
    %675 = vst [vmem:[%s663 + $0x2c] sm:$0x1] %v426
    %676 = vst [vmem:[%s663 + $0x30] sm:$0xe] %v427
    %677 = vst [vmem:[%s663 + $0x34] sm:$0xf] %v430
    %678 = vst [vmem:[%s663 + $0x38] sm:$0x1] %v431
    %679 = vst [vmem:[%s663 + $0x3c] sm:$0xe] %v432
    %680 = vst [vmem:[%s663 + $0x40] sm:$0xf] %v435
    %681 = vst [vmem:[%s663 + $0x44] sm:$0x1] %v436
    %682 = vst [vmem:[%s663 + $0x48] sm:$0xe] %v437
    %683 = vst [vmem:[%s663 + $0x4c] sm:$0xf] %v440
    %684 = vst [vmem:[%s663 + $0x50] sm:$0x1] %v441
    %685 = vst [vmem:[%s663 + $0x54] sm:$0xe] %v442
    %686 = vst [vmem:[%s663 + $0x58] sm:$0xf] %v445
    %687 = vst [vmem:[%s663 + $0x5c] sm:$0x1] %v446
    %688 = vst [vmem:[%s663 + $0x60] sm:$0xe] %v447
    %689 = vst [vmem:[%s663 + $0x64] sm:$0xf] %v450
    %690 = vst [vmem:[%s663 + $0x68] sm:$0x1] %v451
    %691 = vst [vmem:[%s663 + $0x6c] sm:$0xe] %v452
    %692 = vst [vmem:[%s663 + $0x70] sm:$0xf] %v455
    %693 = vst [vmem:[%s663 + $0x74] sm:$0x1] %v456
    %694 = vst [vmem:[%s663 + $0x78] sm:$0xe] %v457
    %695 = vst [vmem:[%s663 + $0x7c] sm:$0xf] %v460
    %696 = vst [vmem:[%s663 + $0x80] sm:$0x1] %v461
    %697 = vst [vmem:[%s663 + $0x84] sm:$0xe] %v462
    %698 = vst [vmem:[%s663 + $0x88] sm:$0xf] %v465
    %699 = vst [vmem:[%s663 + $0x8c] sm:$0x1] %v466
    %700 = vst [vmem:[%s663 + $0x90] sm:$0xe] %v467
    %701 = vst [vmem:[%s663 + $0x94] sm:$0xf] %v470
    %702 = vst [vmem:[%s663 + $0x98] sm:$0x1] %v471
    %703 = vst [vmem:[%s663 + $0x9c] sm:$0xe] %v472
    %704 = vst [vmem:[%s663 + $0xa0] sm:$0xf] %v475
    %705 = vst [vmem:[%s663 + $0xa4] sm:$0x1] %v476
    %706 = vst [vmem:[%s663 + $0xa8] sm:$0xe] %v477
    %707 = vst [vmem:[%s663 + $0xac] sm:$0xf] %v480
    %708 = vst [vmem:[%s663 + $0xb0] sm:$0x1] %v481
    %709 = vst [vmem:[%s663 + $0xb4] sm:$0xe] %v482
    %710 = vst [vmem:[%s663 + $0xb8] sm:$0xf] %v485
    %711 = vst [vmem:[%s663 + $0xbc] sm:$0x1] %v486
    %712 = vst [vmem:[%s663 + $0xf0] sm:$0xe] %v487
    %713 = vst [vmem:[%s663 + $0xf4] sm:$0xf] %v490
    %714 = vst [vmem:[%s663 + $0xf8] sm:$0x1] %v491
    %715 = vst [vmem:[%s663 + $0xfc] sm:$0xe] %v492
    %716 = vst [vmem:[%s663 + $0x100] sm:$0xf] %v495
    %717 = vst [vmem:[%s663 + $0x104] sm:$0x1] %v496
    %718 = vst [vmem:[%s663 + $0x108] sm:$0xe] %v497
    %719 = vst [vmem:[%s663 + $0x10c] sm:$0xf] %v500
    %720 = vst [vmem:[%s663 + $0x110] sm:$0x1] %v501
    %721 = vst [vmem:[%s663 + $0x114] sm:$0xe] %v502
    %722 = vst [vmem:[%s663 + $0x118] sm:$0xf] %v505
    %723 = vst [vmem:[%s663 + $0x11c] sm:$0x1] %v506
    %724 = vst [vmem:[%s663 + $0x120] sm:$0xe] %v507
    %725 = vst [vmem:[%s663 + $0x124] sm:$0xf] %v510
    %726 = vst [vmem:[%s663 + $0x128] sm:$0x1] %v511
    %727 = vst [vmem:[%s663 + $0x12c] sm:$0xe] %v512
    %728 = vst [vmem:[%s663 + $0x130] sm:$0xf] %v515
    %729 = vst [vmem:[%s663 + $0x134] sm:$0x1] %v516
    %730 = vst [vmem:[%s663 + $0x138] sm:$0xe] %v517
    %731 = vst [vmem:[%s663 + $0x13c] sm:$0xf] %v520
    %732 = vst [vmem:[%s663 + $0x140] sm:$0x1] %v521
    %733 = vst [vmem:[%s663 + $0x144] sm:$0xe] %v522
    %734 = vst [vmem:[%s663 + $0x148] sm:$0xf] %v525
    %735 = vst [vmem:[%s663 + $0x14c] sm:$0x1] %v526
    %736 = vst [vmem:[%s663 + $0x150] sm:$0xe] %v527
    %737 = vst [vmem:[%s663 + $0x154] sm:$0xf] %v530
    %738 = vst [vmem:[%s663 + $0x158] sm:$0x1] %v531
    %739 = vst [vmem:[%s663 + $0x15c] sm:$0xe] %v532
    %740 = vst [vmem:[%s663 + $0x160] sm:$0xf] %v535
    %741 = vst [vmem:[%s663 + $0x164] sm:$0x1] %v536
    %742 = vst [vmem:[%s663 + $0x168] sm:$0xe] %v537
    %743 = vst [vmem:[%s663 + $0x16c] sm:$0xf] %v540
    %744 = vst [vmem:[%s663 + $0x170] sm:$0x1] %v541
    %745 = vst [vmem:[%s663 + $0x174] sm:$0xe] %v542
    %746 = vst [vmem:[%s663 + $0x178] sm:$0xf] %v545
    %747 = vst [vmem:[%s663 + $0x17c] sm:$0x1] %v546
    %748 = vst [vmem:[%s663 + $0x180] sm:$0xe] %v547
    %749 = vst [vmem:[%s663 + $0x184] sm:$0xf] %v550
    %750 = vst [vmem:[%s663 + $0x188] sm:$0x1] %v551
    %751 = vst [vmem:[%s663 + $0x18c] sm:$0xe] %v552
    %752 = vst [vmem:[%s663 + $0x190] sm:$0xf] %v555
    %753 = vst [vmem:[%s663 + $0x194] sm:$0x1] %v556
    %754 = vst [vmem:[%s663 + $0x198] sm:$0xe] %v557
    %755 = vst [vmem:[%s663 + $0x19c] sm:$0xf] %v560
    %756 = vst [vmem:[%s663 + $0x1a0] sm:$0x1] %v561
    %757 = vst [vmem:[%s663 + $0x1a4] sm:$0xe] %v562
    %758 = vst [vmem:[%s663 + $0x1a8] sm:$0xf] %v565
    %759 = vst [vmem:[%s663 + $0x1ac] sm:$0x1] %v566
    %v760 = vld [vmem:[#allocation2] sm:$0xf]
    %v761 = vld [vmem:[#allocation2 + $0x4] sm:$0xf]
    %v762 = vld [vmem:[#allocation2 + $0xc] sm:$0xf]
    %v763 = vld [vmem:[#allocation2 + $0x10] sm:$0xf]
    %v764 = vld [vmem:[#allocation2 + $0x18] sm:$0xf]
    %v765 = vld [vmem:[#allocation2 + $0x1c] sm:$0xf]
    %v766 = vld [vmem:[#allocation2 + $0x24] sm:$0xf]
    %v767 = vld [vmem:[#allocation2 + $0x28] sm:$0xf]
    %v768 = vld [vmem:[#allocation2 + $0x30] sm:$0xf]
    %v769 = vld [vmem:[#allocation2 + $0x34] sm:$0xf]
    %v770 = vld [vmem:[#allocation2 + $0x3c] sm:$0xf]
    %v771 = vld [vmem:[#allocation2 + $0x40] sm:$0xf]
    %v772 = vld [vmem:[#allocation2 + $0x48] sm:$0xf]
    %v773 = vld [vmem:[#allocation2 + $0x4c] sm:$0xf]
    %v774 = vld [vmem:[#allocation2 + $0x54] sm:$0xf]
    %v775 = vld [vmem:[#allocation2 + $0x58] sm:$0xf]
    %v776 = vld [vmem:[#allocation2 + $0x60] sm:$0xf]
    %v777 = vld [vmem:[#allocation2 + $0x64] sm:$0xf]
    %v778 = vld [vmem:[#allocation2 + $0x6c] sm:$0xf]
    %v779 = vld [vmem:[#allocation2 + $0x70] sm:$0xf]
    %v780 = vld [vmem:[#allocation2 + $0x78] sm:$0xf]
    %v781 = vld [vmem:[#allocation2 + $0x7c] sm:$0xf]
    %v782 = vld [vmem:[#allocation2 + $0x84] sm:$0xf]
    %v783 = vld [vmem:[#allocation2 + $0x88] sm:$0xf]
    %v784 = vld [vmem:[#allocation2 + $0x90] sm:$0xf]
    %v785 = vld [vmem:[#allocation2 + $0x94] sm:$0xf]
    %v786 = vld [vmem:[#allocation2 + $0x9c] sm:$0xf]
    %v787 = vld [vmem:[#allocation2 + $0xa0] sm:$0xf]
    %v788 = vld [vmem:[#allocation2 + $0xa8] sm:$0xf]
    %v789 = vld [vmem:[#allocation2 + $0xac] sm:$0xf]
    %v790 = vld [vmem:[#allocation2 + $0xb4] sm:$0xf]
    %v791 = vld [vmem:[#allocation2 + $0xb8] sm:$0xf]
    %v792 = vld [vmem:[#allocation2 + $0xc0] sm:$0xf]
    %v793 = vld [vmem:[#allocation2 + $0xc4] sm:$0xf]
    %v794 = vld [vmem:[#allocation2 + $0xcc] sm:$0xf]
    %v795 = vld [vmem:[#allocation2 + $0xd0] sm:$0xf]
    %v796 = vld [vmem:[#allocation2 + $0xd8] sm:$0xf]
    %v797 = vld [vmem:[#allocation2 + $0xdc] sm:$0xf]
    %v798 = vld [vmem:[#allocation2 + $0xe4] sm:$0xf]
    %v799 = vld [vmem:[#allocation2 + $0xe8] sm:$0xf]
    %v800 = vld [vmem:[#allocation2 + $0xf0] sm:$0xf]
    %v801 = vld [vmem:[#allocation2 + $0xf4] sm:$0xf]
    %v802 = vld [vmem:[#allocation2 + $0xfc] sm:$0xf]
    %v803 = vld [vmem:[#allocation2 + $0x100] sm:$0xf]
    %v804 = vld [vmem:[#allocation2 + $0x108] sm:$0xf]
    %v805 = vld [vmem:[#allocation2 + $0x10c] sm:$0xf]
    %v806 = vld [vmem:[#allocation2 + $0x114] sm:$0xf]
    %v807 = vld [vmem:[#allocation2 + $0x118] sm:$0xf]
    %v808 = vld [vmem:[#allocation2 + $0x120] sm:$0xf]
    %v809 = vld [vmem:[#allocation2 + $0x124] sm:$0xf]
    %v810 = vld [vmem:[#allocation2 + $0x12c] sm:$0xf]
    %v811 = vld [vmem:[#allocation2 + $0x130] sm:$0xf]
    %v812 = vld [vmem:[#allocation2 + $0x138] sm:$0xf]
    %v813 = vld [vmem:[#allocation2 + $0x13c] sm:$0xf]
    %v814 = vld [vmem:[#allocation2 + $0x144] sm:$0xf]
    %v815 = vld [vmem:[#allocation2 + $0x148] sm:$0xf]
    %v816 = vld [vmem:[#allocation2 + $0x150] sm:$0xf]
    %v817 = vld [vmem:[#allocation2 + $0x154] sm:$0xf]
    %v818 = vld [vmem:[#allocation2 + $0x15c] sm:$0xf]
    %v819 = vld [vmem:[#allocation2 + $0x160] sm:$0xf]
    %v820 = vld [vmem:[#allocation2 + $0x168] sm:$0xf]
    %v821 = vld [vmem:[#allocation2 + $0x16c] sm:$0xf]
    %v822 = vld [vmem:[#allocation2 + $0x174] sm:$0xf]
    %v823 = vld [vmem:[#allocation2 + $0x178] sm:$0xf]
    %v824 = vld [vmem:[#allocation2 + $0x180] sm:$0xf]
    %v825 = vld [vmem:[#allocation2 + $0x184] sm:$0xf]
    %v826 = vld [vmem:[#allocation2 + $0x18c] sm:$0xf]
    %v827 = vld [vmem:[#allocation2 + $0x190] sm:$0xf]
    %v828 = vld [vmem:[#allocation2 + $0x198] sm:$0xf]
    %v829 = vld [vmem:[#allocation2 + $0x19c] sm:$0xf]
    %v830 = vld [vmem:[#allocation2 + $0x1a4] sm:$0xf]
    %v831 = vld [vmem:[#allocation2 + $0x1a8] sm:$0xf]
    %v832 = vld [vmem:[#allocation2 + $0x1b0] sm:$0xf]
    %v833 = vld [vmem:[#allocation2 + $0x1b4] sm:$0xf]
    %v834 = vld [vmem:[#allocation2 + $0x1bc] sm:$0xf]
    %v835 = vld [vmem:[#allocation2 + $0x1c0] sm:$0xf]
    %v836 = vld [vmem:[#allocation2 + $0x1c8] sm:$0xf]
    %v837 = vld [vmem:[#allocation2 + $0x1cc] sm:$0xf]
    %v838 = vld [vmem:[#allocation2 + $0x1d4] sm:$0xf]
    %v839 = vld [vmem:[#allocation2 + $0x1d8] sm:$0xf]
    %v840 = vld [vmem:[#allocation2] sm:$0xc]
    %v841 = vld [vmem:[#allocation2 + $0x4] sm:$0xf]
    %v842 = vld [vmem:[#allocation2 + $0x8] sm:$0x3]
    %v843 = vld [vmem:[#allocation2 + $0xc] sm:$0xc]
    %v844 = vld [vmem:[#allocation2 + $0x10] sm:$0xf]
    %v845 = vld [vmem:[#allocation2 + $0x14] sm:$0x3]
    %v846 = vld [vmem:[#allocation2 + $0x18] sm:$0xc]
    %v847 = vld [vmem:[#allocation2 + $0x1c] sm:$0xf]
    %v848 = vld [vmem:[#allocation2 + $0x20] sm:$0x3]
    %v849 = vld [vmem:[#allocation2 + $0x24] sm:$0xc]
    %v850 = vld [vmem:[#allocation2 + $0x28] sm:$0xf]
    %v851 = vld [vmem:[#allocation2 + $0x2c] sm:$0x3]
    %v852 = vld [vmem:[#allocation2 + $0x30] sm:$0xc]
    %v853 = vld [vmem:[#allocation2 + $0x34] sm:$0xf]
    %v854 = vld [vmem:[#allocation2 + $0x38] sm:$0x3]
    %v855 = vld [vmem:[#allocation2 + $0x3c] sm:$0xc]
    %v856 = vld [vmem:[#allocation2 + $0x40] sm:$0xf]
    %v857 = vld [vmem:[#allocation2 + $0x44] sm:$0x3]
    %v858 = vld [vmem:[#allocation2 + $0x48] sm:$0xc]
    %v859 = vld [vmem:[#allocation2 + $0x4c] sm:$0xf]
    %v860 = vld [vmem:[#allocation2 + $0x50] sm:$0x3]
    %v861 = vld [vmem:[#allocation2 + $0x54] sm:$0xc]
    %v862 = vld [vmem:[#allocation2 + $0x58] sm:$0xf]
    %v863 = vld [vmem:[#allocation2 + $0x5c] sm:$0x3]
    %v864 = vld [vmem:[#allocation2 + $0x60] sm:$0xc]
    %v865 = vld [vmem:[#allocation2 + $0x64] sm:$0xf]
    %v866 = vld [vmem:[#allocation2 + $0x68] sm:$0x3]
    %v867 = vld [vmem:[#allocation2 + $0x6c] sm:$0xc]
    %v868 = vld [vmem:[#allocation2 + $0x70] sm:$0xf]
    %v869 = vld [vmem:[#allocation2 + $0x74] sm:$0x3]
    %v870 = vld [vmem:[#allocation2 + $0x78] sm:$0xc]
    %v871 = vld [vmem:[#allocation2 + $0x7c] sm:$0xf]
    %v872 = vld [vmem:[#allocation2 + $0x80] sm:$0x3]
    %v873 = vld [vmem:[#allocation2 + $0x84] sm:$0xc]
    %v874 = vld [vmem:[#allocation2 + $0x88] sm:$0xf]
    %v875 = vld [vmem:[#allocation2 + $0x8c] sm:$0x3]
    %v876 = vld [vmem:[#allocation2 + $0x90] sm:$0xc]
    %v877 = vld [vmem:[#allocation2 + $0x94] sm:$0xf]
    %v878 = vld [vmem:[#allocation2 + $0x98] sm:$0x3]
    %v879 = vld [vmem:[#allocation2 + $0x9c] sm:$0xc]
    %v880 = vld [vmem:[#allocation2 + $0xa0] sm:$0xf]
    %v881 = vld [vmem:[#allocation2 + $0xa4] sm:$0x3]
    %v882 = vld [vmem:[#allocation2 + $0xa8] sm:$0xc]
    %v883 = vld [vmem:[#allocation2 + $0xac] sm:$0xf]
    %v884 = vld [vmem:[#allocation2 + $0xb0] sm:$0x3]
    %v885 = vld [vmem:[#allocation2 + $0xb4] sm:$0xc]
    %v886 = vld [vmem:[#allocation2 + $0xb8] sm:$0xf]
    %v887 = vld [vmem:[#allocation2 + $0xbc] sm:$0x3]
    %v888 = vld [vmem:[#allocation2 + $0xc0] sm:$0xc]
    %v889 = vld [vmem:[#allocation2 + $0xc4] sm:$0xf]
    %v890 = vld [vmem:[#allocation2 + $0xc8] sm:$0x3]
    %v891 = vld [vmem:[#allocation2 + $0xcc] sm:$0xc]
    %v892 = vld [vmem:[#allocation2 + $0xd0] sm:$0xf]
    %v893 = vld [vmem:[#allocation2 + $0xd4] sm:$0x3]
    %v894 = vld [vmem:[#allocation2 + $0xd8] sm:$0xc]
    %v895 = vld [vmem:[#allocation2 + $0xdc] sm:$0xf]
    %v896 = vld [vmem:[#allocation2 + $0xe0] sm:$0x3]
    %v897 = vld [vmem:[#allocation2 + $0xe4] sm:$0xc]
    %v898 = vld [vmem:[#allocation2 + $0xe8] sm:$0xf]
    %v899 = vld [vmem:[#allocation2 + $0xec] sm:$0x3]
    %v900 = vld [vmem:[#allocation2 + $0xf0] sm:$0xc]
    %v901 = vld [vmem:[#allocation2 + $0xf4] sm:$0xf]
    %v902 = vld [vmem:[#allocation2 + $0xf8] sm:$0x3]
    %v903 = vld [vmem:[#allocation2 + $0xfc] sm:$0xc]
    %v904 = vld [vmem:[#allocation2 + $0x100] sm:$0xf]
    %v905 = vld [vmem:[#allocation2 + $0x104] sm:$0x3]
    %v906 = vld [vmem:[#allocation2 + $0x108] sm:$0xc]
    %v907 = vld [vmem:[#allocation2 + $0x10c] sm:$0xf]
    %v908 = vld [vmem:[#allocation2 + $0x110] sm:$0x3]
    %v909 = vld [vmem:[#allocation2 + $0x114] sm:$0xc]
    %v910 = vld [vmem:[#allocation2 + $0x118] sm:$0xf]
    %v911 = vld [vmem:[#allocation2 + $0x11c] sm:$0x3]
    %v912 = vld [vmem:[#allocation2 + $0x120] sm:$0xc]
    %v913 = vld [vmem:[#allocation2 + $0x124] sm:$0xf]
    %v914 = vld [vmem:[#allocation2 + $0x128] sm:$0x3]
    %v915 = vld [vmem:[#allocation2 + $0x12c] sm:$0xc]
    %v916 = vld [vmem:[#allocation2 + $0x130] sm:$0xf]
    %v917 = vld [vmem:[#allocation2 + $0x134] sm:$0x3]
    %v918 = vld [vmem:[#allocation2 + $0x138] sm:$0xc]
    %v919 = vld [vmem:[#allocation2 + $0x13c] sm:$0xf]
    %v920 = vld [vmem:[#allocation2 + $0x140] sm:$0x3]
    %v921 = vld [vmem:[#allocation2 + $0x144] sm:$0xc]
    %v922 = vld [vmem:[#allocation2 + $0x148] sm:$0xf]
    %v923 = vld [vmem:[#allocation2 + $0x14c] sm:$0x3]
    %v924 = vld [vmem:[#allocation2 + $0x150] sm:$0xc]
    %v925 = vld [vmem:[#allocation2 + $0x154] sm:$0xf]
    %v926 = vld [vmem:[#allocation2 + $0x158] sm:$0x3]
    %v927 = vld [vmem:[#allocation2 + $0x15c] sm:$0xc]
    %v928 = vld [vmem:[#allocation2 + $0x160] sm:$0xf]
    %v929 = vld [vmem:[#allocation2 + $0x164] sm:$0x3]
    %v930 = vld [vmem:[#allocation2 + $0x168] sm:$0xc]
    %v931 = vld [vmem:[#allocation2 + $0x16c] sm:$0xf]
    %v932 = vld [vmem:[#allocation2 + $0x170] sm:$0x3]
    %v933 = vld [vmem:[#allocation2 + $0x174] sm:$0xc]
    %v934 = vld [vmem:[#allocation2 + $0x178] sm:$0xf]
    %v935 = vld [vmem:[#allocation2 + $0x17c] sm:$0x3]
    %v936 = vld [vmem:[#allocation2 + $0x180] sm:$0xc]
    %v937 = vld [vmem:[#allocation2 + $0x184] sm:$0xf]
    %v938 = vld [vmem:[#allocation2 + $0x188] sm:$0x3]
    %v939 = vld [vmem:[#allocation2 + $0x18c] sm:$0xc]
    %v940 = vld [vmem:[#allocation2 + $0x190] sm:$0xf]
    %v941 = vld [vmem:[#allocation2 + $0x194] sm:$0x3]
    %v942 = vld [vmem:[#allocation2 + $0x198] sm:$0xc]
    %v943 = vld [vmem:[#allocation2 + $0x19c] sm:$0xf]
    %v944 = vld [vmem:[#allocation2 + $0x1a0] sm:$0x3]
    %v945 = vld [vmem:[#allocation2 + $0x1a4] sm:$0xc]
    %v946 = vld [vmem:[#allocation2 + $0x1a8] sm:$0xf]
    %v947 = vld [vmem:[#allocation2 + $0x1ac] sm:$0x3]
    %v948 = vld [vmem:[#allocation2 + $0x1b0] sm:$0xc]
    %v949 = vld [vmem:[#allocation2 + $0x1b4] sm:$0xf]
    %v950 = vld [vmem:[#allocation2 + $0x1b8] sm:$0x3]
    %v951 = vld [vmem:[#allocation2 + $0x1bc] sm:$0xc]
    %v952 = vld [vmem:[#allocation2 + $0x1c0] sm:$0xf]
    %v953 = vld [vmem:[#allocation2 + $0x1c4] sm:$0x3]
    %v954 = vld [vmem:[#allocation2 + $0x1c8] sm:$0xc]
    %v955 = vld [vmem:[#allocation2 + $0x1cc] sm:$0xf]
    %v956 = vld [vmem:[#allocation2 + $0x1d0] sm:$0x3]
    %v957 = vld [vmem:[#allocation2 + $0x1d4] sm:$0xc]
    %v958 = vld [vmem:[#allocation2 + $0x1d8] sm:$0xf]
    %v959 = vld [vmem:[#allocation2 + $0x1dc] sm:$0x3]
    %v1024 = vunpack.c.l.b16 %v760
    %v1025 = vunpack.c.l.b16 %v761
    %v1026 = vunpack.c.l.b16 %v762
    %v1027 = vunpack.c.l.b16 %v763
    %v1028 = vunpack.c.l.b16 %v764
    %v1029 = vunpack.c.l.b16 %v765
    %v1030 = vunpack.c.l.b16 %v766
    %v1031 = vunpack.c.l.b16 %v767
    %v1032 = vunpack.c.l.b16 %v768
    %v1033 = vunpack.c.l.b16 %v769
    %v1034 = vunpack.c.l.b16 %v770
    %v1035 = vunpack.c.l.b16 %v771
    %v1036 = vunpack.c.l.b16 %v772
    %v1037 = vunpack.c.l.b16 %v773
    %v1038 = vunpack.c.l.b16 %v774
    %v1039 = vunpack.c.l.b16 %v775
    %v1040 = vunpack.c.l.b16 %v776
    %v1041 = vunpack.c.l.b16 %v777
    %v1042 = vunpack.c.l.b16 %v778
    %v1043 = vunpack.c.l.b16 %v779
    %v1044 = vunpack.c.l.b16 %v780
    %v1045 = vunpack.c.l.b16 %v781
    %v1046 = vunpack.c.l.b16 %v782
    %v1047 = vunpack.c.l.b16 %v783
    %v1048 = vunpack.c.l.b16 %v784
    %v1049 = vunpack.c.l.b16 %v785
    %v1050 = vunpack.c.l.b16 %v786
    %v1051 = vunpack.c.l.b16 %v787
    %v1052 = vunpack.c.l.b16 %v788
    %v1053 = vunpack.c.l.b16 %v789
    %v1054 = vunpack.c.l.b16 %v790
    %v1055 = vunpack.c.l.b16 %v791
    %v1056 = vunpack.c.l.b16 %v800
    %v1057 = vunpack.c.l.b16 %v801
    %v1058 = vunpack.c.l.b16 %v802
    %v1059 = vunpack.c.l.b16 %v803
    %v1060 = vunpack.c.l.b16 %v804
    %v1061 = vunpack.c.l.b16 %v805
    %v1062 = vunpack.c.l.b16 %v806
    %v1063 = vunpack.c.l.b16 %v807
    %v1064 = vunpack.c.l.b16 %v808
    %v1065 = vunpack.c.l.b16 %v809
    %v1066 = vunpack.c.l.b16 %v810
    %v1067 = vunpack.c.l.b16 %v811
    %v1068 = vunpack.c.l.b16 %v812
    %v1069 = vunpack.c.l.b16 %v813
    %v1070 = vunpack.c.l.b16 %v814
    %v1071 = vunpack.c.l.b16 %v815
    %v1072 = vunpack.c.l.b16 %v816
    %v1073 = vunpack.c.l.b16 %v817
    %v1074 = vunpack.c.l.b16 %v818
    %v1075 = vunpack.c.l.b16 %v819
    %v1076 = vunpack.c.l.b16 %v820
    %v1077 = vunpack.c.l.b16 %v821
    %v1078 = vunpack.c.l.b16 %v822
    %v1079 = vunpack.c.l.b16 %v823
    %v1080 = vunpack.c.l.b16 %v824
    %v1081 = vunpack.c.l.b16 %v825
    %v1082 = vunpack.c.l.b16 %v826
    %v1083 = vunpack.c.l.b16 %v827
    %v1084 = vunpack.c.l.b16 %v828
    %v1085 = vunpack.c.l.b16 %v829
    %v1086 = vunpack.c.l.b16 %v830
    %v1087 = vunpack.c.l.b16 %v831
    %v1088 = vpack.c.b16 %v1025, %v1024
    %v1089 = vpack.c.b16 %v1027, %v1026
    %v1090 = vpack.c.b16 %v1029, %v1028
    %v1091 = vpack.c.b16 %v1031, %v1030
    %v1092 = vpack.c.b16 %v1033, %v1032
    %v1093 = vpack.c.b16 %v1035, %v1034
    %v1094 = vpack.c.b16 %v1037, %v1036
    %v1095 = vpack.c.b16 %v1039, %v1038
    %v1096 = vpack.c.b16 %v1041, %v1040
    %v1097 = vpack.c.b16 %v1043, %v1042
    %v1098 = vpack.c.b16 %v1045, %v1044
    %v1099 = vpack.c.b16 %v1047, %v1046
    %v1100 = vpack.c.b16 %v1049, %v1048
    %v1101 = vpack.c.b16 %v1051, %v1050
    %v1102 = vpack.c.b16 %v1053, %v1052
    %v1103 = vpack.c.b16 %v1055, %v1054
    %v1104 = vpack.c.b16 %v1057, %v1056
    %v1105 = vpack.c.b16 %v1059, %v1058
    %v1106 = vpack.c.b16 %v1061, %v1060
    %v1107 = vpack.c.b16 %v1063, %v1062
    %v1108 = vpack.c.b16 %v1065, %v1064
    %v1109 = vpack.c.b16 %v1067, %v1066
    %v1110 = vpack.c.b16 %v1069, %v1068
    %v1111 = vpack.c.b16 %v1071, %v1070
    %v1112 = vpack.c.b16 %v1073, %v1072
    %v1113 = vpack.c.b16 %v1075, %v1074
    %v1114 = vpack.c.b16 %v1077, %v1076
    %v1115 = vpack.c.b16 %v1079, %v1078
    %v1116 = vpack.c.b16 %v1081, %v1080
    %v1117 = vpack.c.b16 %v1083, %v1082
    %v1118 = vpack.c.b16 %v1085, %v1084
    %v1119 = vpack.c.b16 %v1087, %v1086
    %v1168 = vunpack.c.l.b16 %v792
    %v1169 = vunpack.c.l.b16 %v793
    %v1170 = vunpack.c.l.b16 %v794
    %v1171 = vunpack.c.l.b16 %v795
    %v1172 = vunpack.c.l.b16 %v796
    %v1173 = vunpack.c.l.b16 %v797
    %v1174 = vunpack.c.l.b16 %v798
    %v1175 = vunpack.c.l.b16 %v799
    %v1176 = vunpack.c.l.b16 %v832
    %v1177 = vunpack.c.l.b16 %v833
    %v1178 = vunpack.c.l.b16 %v834
    %v1179 = vunpack.c.l.b16 %v835
    %v1180 = vunpack.c.l.b16 %v836
    %v1181 = vunpack.c.l.b16 %v837
    %v1182 = vunpack.c.l.b16 %v838
    %v1183 = vunpack.c.l.b16 %v839
    %v1184 = vpack.c.b16 %v1169, %v1168
    %v1185 = vpack.c.b16 %v1171, %v1170
    %v1186 = vpack.c.b16 %v1173, %v1172
    %v1187 = vpack.c.b16 %v1175, %v1174
    %v1188 = vpack.c.b16 %v1177, %v1176
    %v1189 = vpack.c.b16 %v1179, %v1178
    %v1190 = vpack.c.b16 %v1181, %v1180
    %v1191 = vpack.c.b16 %v1183, %v1182
    %v1296 = vunpack.c.l.b16 %v840
    %v1297 = vunpack.c.l.b16 %v841
    %v1298 = vunpack.c.l.b16 %v842
    %v1299 = vunpack.c.l.b16 %v843
    %v1300 = vunpack.c.l.b16 %v844
    %v1301 = vunpack.c.l.b16 %v845
    %v1302 = vunpack.c.l.b16 %v846
    %v1303 = vunpack.c.l.b16 %v847
    %v1304 = vunpack.c.l.b16 %v848
    %v1305 = vunpack.c.l.b16 %v849
    %v1306 = vunpack.c.l.b16 %v850
    %v1307 = vunpack.c.l.b16 %v851
    %v1308 = vunpack.c.l.b16 %v852
    %v1309 = vunpack.c.l.b16 %v853
    %v1310 = vunpack.c.l.b16 %v854
    %v1311 = vunpack.c.l.b16 %v855
    %v1312 = vunpack.c.l.b16 %v856
    %v1313 = vunpack.c.l.b16 %v857
    %v1314 = vunpack.c.l.b16 %v858
    %v1315 = vunpack.c.l.b16 %v859
    %v1316 = vunpack.c.l.b16 %v860
    %v1317 = vunpack.c.l.b16 %v861
    %v1318 = vunpack.c.l.b16 %v862
    %v1319 = vunpack.c.l.b16 %v863
    %v1320 = vunpack.c.l.b16 %v864
    %v1321 = vunpack.c.l.b16 %v865
    %v1322 = vunpack.c.l.b16 %v866
    %v1323 = vunpack.c.l.b16 %v867
    %v1324 = vunpack.c.l.b16 %v868
    %v1325 = vunpack.c.l.b16 %v869
    %v1326 = vunpack.c.l.b16 %v870
    %v1327 = vunpack.c.l.b16 %v871
    %v1328 = vunpack.c.l.b16 %v872
    %v1329 = vunpack.c.l.b16 %v873
    %v1330 = vunpack.c.l.b16 %v874
    %v1331 = vunpack.c.l.b16 %v875
    %v1332 = vunpack.c.l.b16 %v876
    %v1333 = vunpack.c.l.b16 %v877
    %v1334 = vunpack.c.l.b16 %v878
    %v1335 = vunpack.c.l.b16 %v879
    %v1336 = vunpack.c.l.b16 %v880
    %v1337 = vunpack.c.l.b16 %v881
    %v1338 = vunpack.c.l.b16 %v882
    %v1339 = vunpack.c.l.b16 %v883
    %v1340 = vunpack.c.l.b16 %v884
    %v1341 = vunpack.c.l.b16 %v885
    %v1342 = vunpack.c.l.b16 %v886
    %v1343 = vunpack.c.l.b16 %v887
    %v1344 = vunpack.c.l.b16 %v900
    %v1345 = vunpack.c.l.b16 %v901
    %v1346 = vunpack.c.l.b16 %v902
    %v1347 = vunpack.c.l.b16 %v903
    %v1348 = vunpack.c.l.b16 %v904
    %v1349 = vunpack.c.l.b16 %v905
    %v1350 = vunpack.c.l.b16 %v906
    %v1351 = vunpack.c.l.b16 %v907
    %v1352 = vunpack.c.l.b16 %v908
    %v1353 = vunpack.c.l.b16 %v909
    %v1354 = vunpack.c.l.b16 %v910
    %v1355 = vunpack.c.l.b16 %v911
    %v1356 = vunpack.c.l.b16 %v912
    %v1357 = vunpack.c.l.b16 %v913
    %v1358 = vunpack.c.l.b16 %v914
    %v1359 = vunpack.c.l.b16 %v915
    %v1360 = vunpack.c.l.b16 %v916
    %v1361 = vunpack.c.l.b16 %v917
    %v1362 = vunpack.c.l.b16 %v918
    %v1363 = vunpack.c.l.b16 %v919
    %v1364 = vunpack.c.l.b16 %v920
    %v1365 = vunpack.c.l.b16 %v921
    %v1366 = vunpack.c.l.b16 %v922
    %v1367 = vunpack.c.l.b16 %v923
    %v1368 = vunpack.c.l.b16 %v924
    %v1369 = vunpack.c.l.b16 %v925
    %v1370 = vunpack.c.l.b16 %v926
    %v1371 = vunpack.c.l.b16 %v927
    %v1372 = vunpack.c.l.b16 %v928
    %v1373 = vunpack.c.l.b16 %v929
    %v1374 = vunpack.c.l.b16 %v930
    %v1375 = vunpack.c.l.b16 %v931
    %v1376 = vunpack.c.l.b16 %v932
    %v1377 = vunpack.c.l.b16 %v933
    %v1378 = vunpack.c.l.b16 %v934
    %v1379 = vunpack.c.l.b16 %v935
    %v1380 = vunpack.c.l.b16 %v936
    %v1381 = vunpack.c.l.b16 %v937
    %v1382 = vunpack.c.l.b16 %v938
    %v1383 = vunpack.c.l.b16 %v939
    %v1384 = vunpack.c.l.b16 %v940
    %v1385 = vunpack.c.l.b16 %v941
    %v1386 = vunpack.c.l.b16 %v942
    %v1387 = vunpack.c.l.b16 %v943
    %v1388 = vunpack.c.l.b16 %v944
    %v1389 = vunpack.c.l.b16 %v945
    %v1390 = vunpack.c.l.b16 %v946
    %v1391 = vunpack.c.l.b16 %v947
    %v1392 = vpack.c.b16 %v1297, %v1296
    %v1393 = vpack.c.b16 %v1298, %v1298
    %v1394 = vpack.c.b16 %v1300, %v1299
    %v1395 = vpack.c.b16 %v1301, %v1301
    %v1396 = vpack.c.b16 %v1303, %v1302
    %v1397 = vpack.c.b16 %v1304, %v1304
    %v1398 = vpack.c.b16 %v1306, %v1305
    %v1399 = vpack.c.b16 %v1307, %v1307
    %v1400 = vpack.c.b16 %v1309, %v1308
    %v1401 = vpack.c.b16 %v1310, %v1310
    %v1402 = vpack.c.b16 %v1312, %v1311
    %v1403 = vpack.c.b16 %v1313, %v1313
    %v1404 = vpack.c.b16 %v1315, %v1314
    %v1405 = vpack.c.b16 %v1316, %v1316
    %v1406 = vpack.c.b16 %v1318, %v1317
    %v1407 = vpack.c.b16 %v1319, %v1319
    %v1408 = vpack.c.b16 %v1321, %v1320
    %v1409 = vpack.c.b16 %v1322, %v1322
    %v1410 = vpack.c.b16 %v1324, %v1323
    %v1411 = vpack.c.b16 %v1325, %v1325
    %v1412 = vpack.c.b16 %v1327, %v1326
    %v1413 = vpack.c.b16 %v1328, %v1328
    %v1414 = vpack.c.b16 %v1330, %v1329
    %v1415 = vpack.c.b16 %v1331, %v1331
    %v1416 = vpack.c.b16 %v1333, %v1332
    %v1417 = vpack.c.b16 %v1334, %v1334
    %v1418 = vpack.c.b16 %v1336, %v1335
    %v1419 = vpack.c.b16 %v1337, %v1337
    %v1420 = vpack.c.b16 %v1339, %v1338
    %v1421 = vpack.c.b16 %v1340, %v1340
    %v1422 = vpack.c.b16 %v1342, %v1341
    %v1423 = vpack.c.b16 %v1343, %v1343
    %v1424 = vpack.c.b16 %v1345, %v1344
    %v1425 = vpack.c.b16 %v1346, %v1346
    %v1426 = vpack.c.b16 %v1348, %v1347
    %v1427 = vpack.c.b16 %v1349, %v1349
    %v1428 = vpack.c.b16 %v1351, %v1350
    %v1429 = vpack.c.b16 %v1352, %v1352
    %v1430 = vpack.c.b16 %v1354, %v1353
    %v1431 = vpack.c.b16 %v1355, %v1355
    %v1432 = vpack.c.b16 %v1357, %v1356
    %v1433 = vpack.c.b16 %v1358, %v1358
    %v1434 = vpack.c.b16 %v1360, %v1359
    %v1435 = vpack.c.b16 %v1361, %v1361
    %v1436 = vpack.c.b16 %v1363, %v1362
    %v1437 = vpack.c.b16 %v1364, %v1364
    %v1438 = vpack.c.b16 %v1366, %v1365
    %v1439 = vpack.c.b16 %v1367, %v1367
    %v1440 = vpack.c.b16 %v1369, %v1368
    %v1441 = vpack.c.b16 %v1370, %v1370
    %v1442 = vpack.c.b16 %v1372, %v1371
    %v1443 = vpack.c.b16 %v1373, %v1373
    %v1444 = vpack.c.b16 %v1375, %v1374
    %v1445 = vpack.c.b16 %v1376, %v1376
    %v1446 = vpack.c.b16 %v1378, %v1377
    %v1447 = vpack.c.b16 %v1379, %v1379
    %v1448 = vpack.c.b16 %v1381, %v1380
    %v1449 = vpack.c.b16 %v1382, %v1382
    %v1450 = vpack.c.b16 %v1384, %v1383
    %v1451 = vpack.c.b16 %v1385, %v1385
    %v1452 = vpack.c.b16 %v1387, %v1386
    %v1453 = vpack.c.b16 %v1388, %v1388
    %v1454 = vpack.c.b16 %v1390, %v1389
    %v1455 = vpack.c.b16 %v1391, %v1391
    %vm1456 = vcmask 1045504
    %v1457 = vrot.slane %v1392, 2
    %v1458 = vrot.slane %v1393, 2
    %v1459 = vsel %vm1456, %v1457, %v1458
    %v1460 = vrot.slane %v1394, 2
    %v1461 = vrot.slane %v1395, 2
    %v1462 = vsel %vm1456, %v1460, %v1461
    %v1463 = vrot.slane %v1396, 2
    %v1464 = vrot.slane %v1397, 2
    %v1465 = vsel %vm1456, %v1463, %v1464
    %v1466 = vrot.slane %v1398, 2
    %v1467 = vrot.slane %v1399, 2
    %v1468 = vsel %vm1456, %v1466, %v1467
    %v1469 = vrot.slane %v1400, 2
    %v1470 = vrot.slane %v1401, 2
    %v1471 = vsel %vm1456, %v1469, %v1470
    %v1472 = vrot.slane %v1402, 2
    %v1473 = vrot.slane %v1403, 2
    %v1474 = vsel %vm1456, %v1472, %v1473
    %v1475 = vrot.slane %v1404, 2
    %v1476 = vrot.slane %v1405, 2
    %v1477 = vsel %vm1456, %v1475, %v1476
    %v1478 = vrot.slane %v1406, 2
    %v1479 = vrot.slane %v1407, 2
    %v1480 = vsel %vm1456, %v1478, %v1479
    %v1481 = vrot.slane %v1408, 2
    %v1482 = vrot.slane %v1409, 2
    %v1483 = vsel %vm1456, %v1481, %v1482
    %v1484 = vrot.slane %v1410, 2
    %v1485 = vrot.slane %v1411, 2
    %v1486 = vsel %vm1456, %v1484, %v1485
    %v1487 = vrot.slane %v1412, 2
    %v1488 = vrot.slane %v1413, 2
    %v1489 = vsel %vm1456, %v1487, %v1488
    %v1490 = vrot.slane %v1414, 2
    %v1491 = vrot.slane %v1415, 2
    %v1492 = vsel %vm1456, %v1490, %v1491
    %v1493 = vrot.slane %v1416, 2
    %v1494 = vrot.slane %v1417, 2
    %v1495 = vsel %vm1456, %v1493, %v1494
    %v1496 = vrot.slane %v1418, 2
    %v1497 = vrot.slane %v1419, 2
    %v1498 = vsel %vm1456, %v1496, %v1497
    %v1499 = vrot.slane %v1420, 2
    %v1500 = vrot.slane %v1421, 2
    %v1501 = vsel %vm1456, %v1499, %v1500
    %v1502 = vrot.slane %v1422, 2
    %v1503 = vrot.slane %v1423, 2
    %v1504 = vsel %vm1456, %v1502, %v1503
    %v1505 = vrot.slane %v1424, 2
    %v1506 = vrot.slane %v1425, 2
    %v1507 = vsel %vm1456, %v1505, %v1506
    %v1508 = vrot.slane %v1426, 2
    %v1509 = vrot.slane %v1427, 2
    %v1510 = vsel %vm1456, %v1508, %v1509
    %v1511 = vrot.slane %v1428, 2
    %v1512 = vrot.slane %v1429, 2
    %v1513 = vsel %vm1456, %v1511, %v1512
    %v1514 = vrot.slane %v1430, 2
    %v1515 = vrot.slane %v1431, 2
    %v1516 = vsel %vm1456, %v1514, %v1515
    %v1517 = vrot.slane %v1432, 2
    %v1518 = vrot.slane %v1433, 2
    %v1519 = vsel %vm1456, %v1517, %v1518
    %v1520 = vrot.slane %v1434, 2
    %v1521 = vrot.slane %v1435, 2
    %v1522 = vsel %vm1456, %v1520, %v1521
    %v1523 = vrot.slane %v1436, 2
    %v1524 = vrot.slane %v1437, 2
    %v1525 = vsel %vm1456, %v1523, %v1524
    %v1526 = vrot.slane %v1438, 2
    %v1527 = vrot.slane %v1439, 2
    %v1528 = vsel %vm1456, %v1526, %v1527
    %v1529 = vrot.slane %v1440, 2
    %v1530 = vrot.slane %v1441, 2
    %v1531 = vsel %vm1456, %v1529, %v1530
    %v1532 = vrot.slane %v1442, 2
    %v1533 = vrot.slane %v1443, 2
    %v1534 = vsel %vm1456, %v1532, %v1533
    %v1535 = vrot.slane %v1444, 2
    %v1536 = vrot.slane %v1445, 2
    %v1537 = vsel %vm1456, %v1535, %v1536
    %v1538 = vrot.slane %v1446, 2
    %v1539 = vrot.slane %v1447, 2
    %v1540 = vsel %vm1456, %v1538, %v1539
    %v1541 = vrot.slane %v1448, 2
    %v1542 = vrot.slane %v1449, 2
    %v1543 = vsel %vm1456, %v1541, %v1542
    %v1544 = vrot.slane %v1450, 2
    %v1545 = vrot.slane %v1451, 2
    %v1546 = vsel %vm1456, %v1544, %v1545
    %v1547 = vrot.slane %v1452, 2
    %v1548 = vrot.slane %v1453, 2
    %v1549 = vsel %vm1456, %v1547, %v1548
    %v1550 = vrot.slane %v1454, 2
    %v1551 = vrot.slane %v1455, 2
    %v1552 = vsel %vm1456, %v1550, %v1551
    %v1609 = vunpack.c.l.b16 %v888
    %v1610 = vunpack.c.l.b16 %v889
    %v1611 = vunpack.c.l.b16 %v890
    %v1612 = vunpack.c.l.b16 %v891
    %v1613 = vunpack.c.l.b16 %v892
    %v1614 = vunpack.c.l.b16 %v893
    %v1615 = vunpack.c.l.b16 %v894
    %v1616 = vunpack.c.l.b16 %v895
    %v1617 = vunpack.c.l.b16 %v896
    %v1618 = vunpack.c.l.b16 %v897
    %v1619 = vunpack.c.l.b16 %v898
    %v1620 = vunpack.c.l.b16 %v899
    %v1621 = vunpack.c.l.b16 %v948
    %v1622 = vunpack.c.l.b16 %v949
    %v1623 = vunpack.c.l.b16 %v950
    %v1624 = vunpack.c.l.b16 %v951
    %v1625 = vunpack.c.l.b16 %v952
    %v1626 = vunpack.c.l.b16 %v953
    %v1627 = vunpack.c.l.b16 %v954
    %v1628 = vunpack.c.l.b16 %v955
    %v1629 = vunpack.c.l.b16 %v956
    %v1630 = vunpack.c.l.b16 %v957
    %v1631 = vunpack.c.l.b16 %v958
    %v1632 = vunpack.c.l.b16 %v959
    %v1633 = vpack.c.b16 %v1610, %v1609
    %v1634 = vpack.c.b16 %v1611, %v1611
    %v1635 = vpack.c.b16 %v1613, %v1612
    %v1636 = vpack.c.b16 %v1614, %v1614
    %v1637 = vpack.c.b16 %v1616, %v1615
    %v1638 = vpack.c.b16 %v1617, %v1617
    %v1639 = vpack.c.b16 %v1619, %v1618
    %v1640 = vpack.c.b16 %v1620, %v1620
    %v1641 = vpack.c.b16 %v1622, %v1621
    %v1642 = vpack.c.b16 %v1623, %v1623
    %v1643 = vpack.c.b16 %v1625, %v1624
    %v1644 = vpack.c.b16 %v1626, %v1626
    %v1645 = vpack.c.b16 %v1628, %v1627
    %v1646 = vpack.c.b16 %v1629, %v1629
    %v1647 = vpack.c.b16 %v1631, %v1630
    %v1648 = vpack.c.b16 %v1632, %v1632
    %v1649 = vrot.slane %v1633, 2
    %v1650 = vrot.slane %v1634, 2
    %v1651 = vsel %vm1456, %v1649, %v1650
    %v1652 = vrot.slane %v1635, 2
    %v1653 = vrot.slane %v1636, 2
    %v1654 = vsel %vm1456, %v1652, %v1653
    %v1655 = vrot.slane %v1637, 2
    %v1656 = vrot.slane %v1638, 2
    %v1657 = vsel %vm1456, %v1655, %v1656
    %v1658 = vrot.slane %v1639, 2
    %v1659 = vrot.slane %v1640, 2
    %v1660 = vsel %vm1456, %v1658, %v1659
    %v1661 = vrot.slane %v1641, 2
    %v1662 = vrot.slane %v1642, 2
    %v1663 = vsel %vm1456, %v1661, %v1662
    %v1664 = vrot.slane %v1643, 2
    %v1665 = vrot.slane %v1644, 2
    %v1666 = vsel %vm1456, %v1664, %v1665
    %v1667 = vrot.slane %v1645, 2
    %v1668 = vrot.slane %v1646, 2
    %v1669 = vsel %vm1456, %v1667, %v1668
    %v1670 = vrot.slane %v1647, 2
    %v1671 = vrot.slane %v1648, 2
    %v1672 = vsel %vm1456, %v1670, %v1671
    %v1681 = vld [vmem:[%s1] sm:$0xf]
    %v1682 = vld [vmem:[%s1 + $0x4] sm:$0xf]
    %v1683 = vld [vmem:[%s1 + $0x8] sm:$0xf]
    %v1684 = vld [vmem:[%s1 + $0xc] sm:$0xf]
    %v1685 = vld [vmem:[%s1 + $0x10] sm:$0xf]
    %v1686 = vld [vmem:[%s1 + $0x14] sm:$0xf]
    %v1687 = vld [vmem:[%s1 + $0x18] sm:$0xf]
    %v1688 = vld [vmem:[%s1 + $0x1c] sm:$0xf]
    %v1689 = vld [vmem:[%s1 + $0x20] sm:$0xf]
    %v1690 = vld [vmem:[%s1 + $0x24] sm:$0xf]
    %v1691 = vld [vmem:[%s1 + $0x28] sm:$0xf]
    %v1692 = vld [vmem:[%s1 + $0x2c] sm:$0xf]
    %v1693 = vld [vmem:[%s1 + $0x30] sm:$0xf]
    %v1694 = vld [vmem:[%s1 + $0x34] sm:$0xf]
    %v1695 = vld [vmem:[%s1 + $0x38] sm:$0xf]
    %v1696 = vld [vmem:[%s1 + $0x3c] sm:$0xf]
    %v1697 = vld [vmem:[%s1 + $0x40] sm:$0xf]
    %v1698 = vld [vmem:[%s1 + $0x44] sm:$0xf]
    %v1699 = vld [vmem:[%s1 + $0x48] sm:$0xf]
    %v1700 = vld [vmem:[%s1 + $0x4c] sm:$0xf]
    %v1701 = vld [vmem:[%s1 + $0x50] sm:$0xf]
    %v1702 = vld [vmem:[%s1 + $0x54] sm:$0xf]
    %v1703 = vld [vmem:[%s1 + $0x58] sm:$0xf]
    %v1704 = vld [vmem:[%s1 + $0x5c] sm:$0xf]
    %v1705 = vld [vmem:[%s1 + $0x60] sm:$0xf]
    %v1706 = vld [vmem:[%s1 + $0x64] sm:$0xf]
    %v1707 = vld [vmem:[%s1 + $0x68] sm:$0xf]
    %v1708 = vld [vmem:[%s1 + $0x6c] sm:$0xf]
    %v1709 = vld [vmem:[%s1 + $0x70] sm:$0xf]
    %v1710 = vld [vmem:[%s1 + $0x74] sm:$0xf]
    %v1711 = vld [vmem:[%s1 + $0x78] sm:$0xf]
    %v1712 = vld [vmem:[%s1 + $0x7c] sm:$0xf]
    %v1713 = vld [vmem:[%s1 + $0x80] sm:$0xf]
    %v1714 = vld [vmem:[%s1 + $0x84] sm:$0xf]
    %v1715 = vld [vmem:[%s1 + $0x88] sm:$0xf]
    %v1716 = vld [vmem:[%s1 + $0x8c] sm:$0xf]
    %v1717 = vld [vmem:[%s1 + $0x90] sm:$0xf]
    %v1718 = vld [vmem:[%s1 + $0x94] sm:$0xf]
    %v1719 = vld [vmem:[%s1 + $0x98] sm:$0xf]
    %v1720 = vld [vmem:[%s1 + $0x9c] sm:$0xf]
    %v1721 = vld [vmem:[%s1 + $0xa0] sm:$0xf]
    %v1722 = vld [vmem:[%s1 + $0xa4] sm:$0xf]
    %v1723 = vld [vmem:[%s1 + $0xa8] sm:$0xf]
    %v1724 = vld [vmem:[%s1 + $0xac] sm:$0xf]
    %v1725 = vld [vmem:[%s1 + $0xb0] sm:$0xf]
    %v1726 = vld [vmem:[%s1 + $0xb4] sm:$0xf]
    %v1727 = vld [vmem:[%s1 + $0xb8] sm:$0xf]
    %v1728 = vld [vmem:[%s1 + $0xbc] sm:$0xf]
    %v1729 = vld [vmem:[%s1 + $0xc0] sm:$0xf]
    %v1730 = vld [vmem:[%s1 + $0xc4] sm:$0xf]
    %v1731 = vld [vmem:[%s1 + $0xc8] sm:$0xf]
    %v1732 = vld [vmem:[%s1 + $0xcc] sm:$0xf]
    %v1733 = vld [vmem:[%s1 + $0xd0] sm:$0xf]
    %v1734 = vld [vmem:[%s1 + $0xd4] sm:$0xf]
    %v1735 = vld [vmem:[%s1 + $0xd8] sm:$0xf]
    %v1736 = vld [vmem:[%s1 + $0xdc] sm:$0xf]
    %v1737 = vld [vmem:[%s1 + $0xe0] sm:$0xf]
    %v1738 = vld [vmem:[%s1 + $0xe4] sm:$0xf]
    %v1739 = vld [vmem:[%s1 + $0xe8] sm:$0xf]
    %v1740 = vld [vmem:[%s1 + $0xec] sm:$0xf]
    %v1741 = vld [vmem:[%s1 + $0xf0] sm:$0xf]
    %v1742 = vld [vmem:[%s1 + $0xf4] sm:$0xf]
    %v1743 = vld [vmem:[%s1 + $0xf8] sm:$0xf]
    %v1744 = vld [vmem:[%s1 + $0xfc] sm:$0xf]
    %v1745 = vld [vmem:[%s2] sm:$0x1]
    %v1747 = vlaneseq
    %v1748 = vshrl.u32 %v1747, 7
    %v1749 = vsub.s32 0, %v1748
    %v1750 = vrot.slane %v1745, %v1749
    %v1816 = vunpack.c.l.b16 %v1681
    %v1817 = vunpack.c.l.b16 %v1682
    %v1818 = vunpack.c.l.b16 %v1683
    %v1819 = vunpack.c.l.b16 %v1684
    %v1820 = vunpack.c.l.b16 %v1685
    %v1821 = vunpack.c.l.b16 %v1686
    %v1822 = vunpack.c.l.b16 %v1687
    %v1823 = vunpack.c.l.b16 %v1688
    %v1824 = vunpack.c.l.b16 %v1689
    %v1825 = vunpack.c.l.b16 %v1690
    %v1826 = vunpack.c.l.b16 %v1691
    %v1827 = vunpack.c.l.b16 %v1692
    %v1828 = vunpack.c.l.b16 %v1693
    %v1829 = vunpack.c.l.b16 %v1694
    %v1830 = vunpack.c.l.b16 %v1695
    %v1831 = vunpack.c.l.b16 %v1696
    %v1832 = vunpack.c.l.b16 %v1697
    %v1833 = vunpack.c.l.b16 %v1698
    %v1834 = vunpack.c.l.b16 %v1699
    %v1835 = vunpack.c.l.b16 %v1700
    %v1836 = vunpack.c.l.b16 %v1701
    %v1837 = vunpack.c.l.b16 %v1702
    %v1838 = vunpack.c.l.b16 %v1703
    %v1839 = vunpack.c.l.b16 %v1704
    %v1840 = vunpack.c.l.b16 %v1705
    %v1841 = vunpack.c.l.b16 %v1706
    %v1842 = vunpack.c.l.b16 %v1707
    %v1843 = vunpack.c.l.b16 %v1708
    %v1844 = vunpack.c.l.b16 %v1709
    %v1845 = vunpack.c.l.b16 %v1710
    %v1846 = vunpack.c.l.b16 %v1711
    %v1847 = vunpack.c.l.b16 %v1712
    %v1848 = vunpack.c.l.b16 %v1713
    %v1849 = vunpack.c.l.b16 %v1714
    %v1850 = vunpack.c.l.b16 %v1715
    %v1851 = vunpack.c.l.b16 %v1716
    %v1852 = vunpack.c.l.b16 %v1717
    %v1853 = vunpack.c.l.b16 %v1718
    %v1854 = vunpack.c.l.b16 %v1719
    %v1855 = vunpack.c.l.b16 %v1720
    %v1856 = vunpack.c.l.b16 %v1721
    %v1857 = vunpack.c.l.b16 %v1722
    %v1858 = vunpack.c.l.b16 %v1723
    %v1859 = vunpack.c.l.b16 %v1724
    %v1860 = vunpack.c.l.b16 %v1725
    %v1861 = vunpack.c.l.b16 %v1726
    %v1862 = vunpack.c.l.b16 %v1727
    %v1863 = vunpack.c.l.b16 %v1728
    %v1864 = vunpack.c.l.b16 %v1729
    %v1865 = vunpack.c.l.b16 %v1730
    %v1866 = vunpack.c.l.b16 %v1731
    %v1867 = vunpack.c.l.b16 %v1732
    %v1868 = vunpack.c.l.b16 %v1733
    %v1869 = vunpack.c.l.b16 %v1734
    %v1870 = vunpack.c.l.b16 %v1735
    %v1871 = vunpack.c.l.b16 %v1736
    %v1872 = vunpack.c.l.b16 %v1737
    %v1873 = vunpack.c.l.b16 %v1738
    %v1874 = vunpack.c.l.b16 %v1739
    %v1875 = vunpack.c.l.b16 %v1740
    %v1876 = vunpack.c.l.b16 %v1741
    %v1877 = vunpack.c.l.b16 %v1742
    %v1878 = vunpack.c.l.b16 %v1743
    %v1879 = vunpack.c.l.b16 %v1744
    %v1880 = vpack.c.b16 %v1817, %v1816
    %v1881 = vpack.c.b16 %v1819, %v1818
    %v1882 = vpack.c.b16 %v1821, %v1820
    %v1883 = vpack.c.b16 %v1823, %v1822
    %v1884 = vpack.c.b16 %v1825, %v1824
    %v1885 = vpack.c.b16 %v1827, %v1826
    %v1886 = vpack.c.b16 %v1829, %v1828
    %v1887 = vpack.c.b16 %v1831, %v1830
    %v1888 = vpack.c.b16 %v1833, %v1832
    %v1889 = vpack.c.b16 %v1835, %v1834
    %v1890 = vpack.c.b16 %v1837, %v1836
    %v1891 = vpack.c.b16 %v1839, %v1838
    %v1892 = vpack.c.b16 %v1841, %v1840
    %v1893 = vpack.c.b16 %v1843, %v1842
    %v1894 = vpack.c.b16 %v1845, %v1844
    %v1895 = vpack.c.b16 %v1847, %v1846
    %v1896 = vpack.c.b16 %v1849, %v1848
    %v1897 = vpack.c.b16 %v1851, %v1850
    %v1898 = vpack.c.b16 %v1853, %v1852
    %v1899 = vpack.c.b16 %v1855, %v1854
    %v1900 = vpack.c.b16 %v1857, %v1856
    %v1901 = vpack.c.b16 %v1859, %v1858
    %v1902 = vpack.c.b16 %v1861, %v1860
    %v1903 = vpack.c.b16 %v1863, %v1862
    %v1904 = vpack.c.b16 %v1865, %v1864
    %v1905 = vpack.c.b16 %v1867, %v1866
    %v1906 = vpack.c.b16 %v1869, %v1868
    %v1907 = vpack.c.b16 %v1871, %v1870
    %v1908 = vpack.c.b16 %v1873, %v1872
    %v1909 = vpack.c.b16 %v1875, %v1874
    %v1910 = vpack.c.b16 %v1877, %v1876
    %v1911 = vpack.c.b16 %v1879, %v1878
    %1944 = vmatprep.subr.bf16.mxu0 0
    %1945 = vmatpush1.bf16.msra.mxu0 %v1887
    %1946 = vmatprep.subr.bf16.mxu0 0
    %1947 = vmatpush1.bf16.msra.mxu0 %v1886
    %1948 = vmatprep.subr.bf16.mxu0 0
    %1949 = vmatpush1.bf16.msra.mxu0 %v1885
    %1950 = vmatprep.subr.bf16.mxu0 0
    %1951 = vmatpush1.bf16.msra.mxu0 %v1884
    %1952 = vmatprep.subr.bf16.mxu0 0
    %1953 = vmatpush1.bf16.msra.mxu0 %v1883
    %1954 = vmatprep.subr.bf16.mxu0 0
    %1955 = vmatpush1.bf16.msra.mxu0 %v1882
    %1956 = vmatprep.subr.bf16.mxu0 0
    %1957 = vmatpush1.bf16.msra.mxu0 %v1881
    %1958 = vmatprep.subr.bf16.mxu0 0
    %1959 = vmatpush1.bf16.msra.mxu0 %v1880
    %1960 = vmatprep.subr.bf16.mxu0 0
    %1961 = vmatpush2.bf16.msra.mxu0 %v1895
    %1962 = vmatprep.subr.bf16.mxu0 0
    %1963 = vmatpush2.bf16.msra.mxu0 %v1894
    %1964 = vmatprep.subr.bf16.mxu0 0
    %1965 = vmatpush2.bf16.msra.mxu0 %v1893
    %1966 = vmatprep.subr.bf16.mxu0 0
    %1967 = vmatpush2.bf16.msra.mxu0 %v1892
    %1968 = vmatprep.subr.bf16.mxu0 0
    %1969 = vmatpush2.bf16.msra.mxu0 %v1891
    %1970 = vmatprep.subr.bf16.mxu0 0
    %1971 = vmatpush2.bf16.msra.mxu0 %v1890
    %1972 = vmatprep.subr.bf16.mxu0 0
    %1973 = vmatpush2.bf16.msra.mxu0 %v1889
    %1974 = vmatprep.subr.bf16.mxu0 0
    %1975 = vmatpush2.bf16.msra.mxu0 %v1888
    %1976 = vmatprep.mubr.bf16.mxu0 %v1092
    %1977 = vmatmul.mubr.bf16.gmra.mxu0 %v1088
    %v1978 = vpop.f32.mrf.mxu0
    %v1979 = vadd.f32 %v1750, %v1978
    %v1980 = vpop.f32.mrf.mxu0
    %v1981 = vpop.f32.mrf.mxu0
    %v1982 = vadd.f32 %v1750, %v1981
    %v1983 = vpop.f32.mrf.mxu0
    %1984 = vmatprep.mubr.bf16.mxu0 %v1093
    %1985 = vmatmul.mubr.bf16.gmra.mxu0 %v1089
    %v1986 = vpop.f32.mrf.mxu0
    %v1987 = vadd.f32 %v1750, %v1986
    %v1988 = vpop.f32.mrf.mxu0
    %v1989 = vpop.f32.mrf.mxu0
    %v1990 = vadd.f32 %v1750, %v1989
    %v1991 = vpop.f32.mrf.mxu0
    %1992 = vmatprep.mubr.bf16.mxu0 %v1094
    %1993 = vmatmul.mubr.bf16.gmra.mxu0 %v1090
    %v1994 = vpop.f32.mrf.mxu0
    %v1995 = vadd.f32 %v1750, %v1994
    %v1996 = vpop.f32.mrf.mxu0
    %v1997 = vpop.f32.mrf.mxu0
    %v1998 = vadd.f32 %v1750, %v1997
    %v1999 = vpop.f32.mrf.mxu0
    %2000 = vmatprep.mubr.bf16.mxu0 %v1095
    %2001 = vmatmul.mubr.bf16.gmra.mxu0 %v1091
    %v2002 = vpop.f32.mrf.mxu0
    %v2003 = vadd.f32 %v1750, %v2002
    %v2004 = vpop.f32.mrf.mxu0
    %v2005 = vpop.f32.mrf.mxu0
    %v2006 = vadd.f32 %v1750, %v2005
    %v2007 = vpop.f32.mrf.mxu0
    %2008 = vmatprep.mubr.bf16.mxu0 %v1096
    %2009 = vmatmul.mubr.bf16.gmra.mxu0 %v1092
    %v2010 = vpop.f32.mrf.mxu0
    %v2011 = vadd.f32 %v1750, %v2010
    %v2012 = vpop.f32.mrf.mxu0
    %v2013 = vpop.f32.mrf.mxu0
    %v2014 = vadd.f32 %v1750, %v2013
    %v2015 = vpop.f32.mrf.mxu0
    %2016 = vmatprep.mubr.bf16.mxu0 %v1097
    %2017 = vmatmul.mubr.bf16.gmra.mxu0 %v1093
    %v2018 = vpop.f32.mrf.mxu0
    %v2019 = vadd.f32 %v1750, %v2018
    %v2020 = vpop.f32.mrf.mxu0
    %v2021 = vpop.f32.mrf.mxu0
    %v2022 = vadd.f32 %v1750, %v2021
    %v2023 = vpop.f32.mrf.mxu0
    %2024 = vmatprep.mubr.bf16.mxu0 %v1098
    %2025 = vmatmul.mubr.bf16.gmra.mxu0 %v1094
    %v2026 = vpop.f32.mrf.mxu0
    %v2027 = vadd.f32 %v1750, %v2026
    %v2028 = vpop.f32.mrf.mxu0
    %v2029 = vpop.f32.mrf.mxu0
    %v2030 = vadd.f32 %v1750, %v2029
    %v2031 = vpop.f32.mrf.mxu0
    %2032 = vmatprep.mubr.bf16.mxu0 %v1099
    %2033 = vmatmul.mubr.bf16.gmra.mxu0 %v1095
    %v2034 = vpop.f32.mrf.mxu0
    %v2035 = vadd.f32 %v1750, %v2034
    %v2036 = vpop.f32.mrf.mxu0
    %v2037 = vpop.f32.mrf.mxu0
    %v2038 = vadd.f32 %v1750, %v2037
    %v2039 = vpop.f32.mrf.mxu0
    %2040 = vmatprep.mubr.bf16.mxu0 %v1100
    %2041 = vmatmul.mubr.bf16.gmra.mxu0 %v1096
    %v2042 = vpop.f32.mrf.mxu0
    %v2043 = vadd.f32 %v1750, %v2042
    %v2044 = vpop.f32.mrf.mxu0
    %v2045 = vpop.f32.mrf.mxu0
    %v2046 = vadd.f32 %v1750, %v2045
    %v2047 = vpop.f32.mrf.mxu0
    %2048 = vmatprep.mubr.bf16.mxu0 %v1101
    %2049 = vmatmul.mubr.bf16.gmra.mxu0 %v1097
    %v2050 = vpop.f32.mrf.mxu0
    %v2051 = vadd.f32 %v1750, %v2050
    %v2052 = vpop.f32.mrf.mxu0
    %v2053 = vpop.f32.mrf.mxu0
    %v2054 = vadd.f32 %v1750, %v2053
    %v2055 = vpop.f32.mrf.mxu0
    %2056 = vmatprep.mubr.bf16.mxu0 %v1102
    %2057 = vmatmul.mubr.bf16.gmra.mxu0 %v1098
    %v2058 = vpop.f32.mrf.mxu0
    %v2059 = vadd.f32 %v1750, %v2058
    %v2060 = vpop.f32.mrf.mxu0
    %v2061 = vpop.f32.mrf.mxu0
    %v2062 = vadd.f32 %v1750, %v2061
    %v2063 = vpop.f32.mrf.mxu0
    %2064 = vmatprep.mubr.bf16.mxu0 %v1103
    %2065 = vmatmul.mubr.bf16.gmra.mxu0 %v1099
    %v2066 = vpop.f32.mrf.mxu0
    %v2067 = vadd.f32 %v1750, %v2066
    %v2068 = vpop.f32.mrf.mxu0
    %v2069 = vpop.f32.mrf.mxu0
    %v2070 = vadd.f32 %v1750, %v2069
    %v2071 = vpop.f32.mrf.mxu0
    %2072 = vmatprep.mubr.bf16.mxu0 %v1184
    %2073 = vmatmul.mubr.bf16.gmra.mxu0 %v1100
    %v2074 = vpop.f32.mrf.mxu0
    %v2075 = vadd.f32 %v1750, %v2074
    %v2076 = vpop.f32.mrf.mxu0
    %v2077 = vpop.f32.mrf.mxu0
    %v2078 = vadd.f32 %v1750, %v2077
    %v2079 = vpop.f32.mrf.mxu0
    %2080 = vmatprep.mubr.bf16.mxu0 %v1185
    %2081 = vmatmul.mubr.bf16.gmra.mxu0 %v1101
    %v2082 = vpop.f32.mrf.mxu0
    %v2083 = vadd.f32 %v1750, %v2082
    %v2084 = vpop.f32.mrf.mxu0
    %v2085 = vpop.f32.mrf.mxu0
    %v2086 = vadd.f32 %v1750, %v2085
    %v2087 = vpop.f32.mrf.mxu0
    %2088 = vmatprep.mubr.bf16.mxu0 %v1186
    %2089 = vmatmul.mubr.bf16.gmra.mxu0 %v1102
    %v2090 = vpop.f32.mrf.mxu0
    %v2091 = vadd.f32 %v1750, %v2090
    %v2092 = vpop.f32.mrf.mxu0
    %v2093 = vpop.f32.mrf.mxu0
    %v2094 = vadd.f32 %v1750, %v2093
    %v2095 = vpop.f32.mrf.mxu0
    %2096 = vmatprep.mubr.bf16.mxu0 %v1187
    %2097 = vmatmul.mubr.bf16.gmra.mxu0 %v1103
    %v2098 = vpop.f32.mrf.mxu0
    %v2099 = vadd.f32 %v1750, %v2098
    %v2100 = vpop.f32.mrf.mxu0
    %v2101 = vpop.f32.mrf.mxu0
    %v2102 = vadd.f32 %v1750, %v2101
    %v2103 = vpop.f32.mrf.mxu0
    %2104 = vmatprep.mubr.bf16.mxu0 %v1108
    %2105 = vmatmul.mubr.bf16.gmra.mxu0 %v1104
    %v2106 = vpop.f32.mrf.mxu0
    %v2107 = vadd.f32 %v1750, %v2106
    %v2108 = vpop.f32.mrf.mxu0
    %v2109 = vpop.f32.mrf.mxu0
    %v2110 = vadd.f32 %v1750, %v2109
    %v2111 = vpop.f32.mrf.mxu0
    %2112 = vmatprep.mubr.bf16.mxu0 %v1109
    %2113 = vmatmul.mubr.bf16.gmra.mxu0 %v1105
    %v2114 = vpop.f32.mrf.mxu0
    %v2115 = vadd.f32 %v1750, %v2114
    %v2116 = vpop.f32.mrf.mxu0
    %v2117 = vpop.f32.mrf.mxu0
    %v2118 = vadd.f32 %v1750, %v2117
    %v2119 = vpop.f32.mrf.mxu0
    %2120 = vmatprep.mubr.bf16.mxu0 %v1110
    %2121 = vmatmul.mubr.bf16.gmra.mxu0 %v1106
    %v2122 = vpop.f32.mrf.mxu0
    %v2123 = vadd.f32 %v1750, %v2122
    %v2124 = vpop.f32.mrf.mxu0
    %v2125 = vpop.f32.mrf.mxu0
    %v2126 = vadd.f32 %v1750, %v2125
    %v2127 = vpop.f32.mrf.mxu0
    %2128 = vmatprep.mubr.bf16.mxu0 %v1111
    %2129 = vmatmul.mubr.bf16.gmra.mxu0 %v1107
    %v2130 = vpop.f32.mrf.mxu0
    %v2131 = vadd.f32 %v1750, %v2130
    %v2132 = vpop.f32.mrf.mxu0
    %v2133 = vpop.f32.mrf.mxu0
    %v2134 = vadd.f32 %v1750, %v2133
    %v2135 = vpop.f32.mrf.mxu0
    %2136 = vmatprep.mubr.bf16.mxu0 %v1112
    %2137 = vmatmul.mubr.bf16.gmra.mxu0 %v1108
    %v2138 = vpop.f32.mrf.mxu0
    %v2139 = vadd.f32 %v1750, %v2138
    %v2140 = vpop.f32.mrf.mxu0
    %v2141 = vpop.f32.mrf.mxu0
    %v2142 = vadd.f32 %v1750, %v2141
    %v2143 = vpop.f32.mrf.mxu0
    %2144 = vmatprep.mubr.bf16.mxu0 %v1113
    %2145 = vmatmul.mubr.bf16.gmra.mxu0 %v1109
    %v2146 = vpop.f32.mrf.mxu0
    %v2147 = vadd.f32 %v1750, %v2146
    %v2148 = vpop.f32.mrf.mxu0
    %v2149 = vpop.f32.mrf.mxu0
    %v2150 = vadd.f32 %v1750, %v2149
    %v2151 = vpop.f32.mrf.mxu0
    %2152 = vmatprep.mubr.bf16.mxu0 %v1114
    %2153 = vmatmul.mubr.bf16.gmra.mxu0 %v1110
    %v2154 = vpop.f32.mrf.mxu0
    %v2155 = vadd.f32 %v1750, %v2154
    %v2156 = vpop.f32.mrf.mxu0
    %v2157 = vpop.f32.mrf.mxu0
    %v2158 = vadd.f32 %v1750, %v2157
    %v2159 = vpop.f32.mrf.mxu0
    %2160 = vmatprep.mubr.bf16.mxu0 %v1115
    %2161 = vmatmul.mubr.bf16.gmra.mxu0 %v1111
    %v2162 = vpop.f32.mrf.mxu0
    %v2163 = vadd.f32 %v1750, %v2162
    %v2164 = vpop.f32.mrf.mxu0
    %v2165 = vpop.f32.mrf.mxu0
    %v2166 = vadd.f32 %v1750, %v2165
    %v2167 = vpop.f32.mrf.mxu0
    %2168 = vmatprep.mubr.bf16.mxu0 %v1116
    %2169 = vmatmul.mubr.bf16.gmra.mxu0 %v1112
    %v2170 = vpop.f32.mrf.mxu0
    %v2171 = vadd.f32 %v1750, %v2170
    %v2172 = vpop.f32.mrf.mxu0
    %v2173 = vpop.f32.mrf.mxu0
    %v2174 = vadd.f32 %v1750, %v2173
    %v2175 = vpop.f32.mrf.mxu0
    %2176 = vmatprep.mubr.bf16.mxu0 %v1117
    %2177 = vmatmul.mubr.bf16.gmra.mxu0 %v1113
    %v2178 = vpop.f32.mrf.mxu0
    %v2179 = vadd.f32 %v1750, %v2178
    %v2180 = vpop.f32.mrf.mxu0
    %v2181 = vpop.f32.mrf.mxu0
    %v2182 = vadd.f32 %v1750, %v2181
    %v2183 = vpop.f32.mrf.mxu0
    %2184 = vmatprep.mubr.bf16.mxu0 %v1118
    %2185 = vmatmul.mubr.bf16.gmra.mxu0 %v1114
    %v2186 = vpop.f32.mrf.mxu0
    %v2187 = vadd.f32 %v1750, %v2186
    %v2188 = vpop.f32.mrf.mxu0
    %v2189 = vpop.f32.mrf.mxu0
    %v2190 = vadd.f32 %v1750, %v2189
    %v2191 = vpop.f32.mrf.mxu0
    %2192 = vmatprep.mubr.bf16.mxu0 %v1119
    %2193 = vmatmul.mubr.bf16.gmra.mxu0 %v1115
    %v2194 = vpop.f32.mrf.mxu0
    %v2195 = vadd.f32 %v1750, %v2194
    %v2196 = vpop.f32.mrf.mxu0
    %v2197 = vpop.f32.mrf.mxu0
    %v2198 = vadd.f32 %v1750, %v2197
    %v2199 = vpop.f32.mrf.mxu0
    %2200 = vmatprep.mubr.bf16.mxu0 %v1188
    %2201 = vmatmul.mubr.bf16.gmra.mxu0 %v1116
    %v2202 = vpop.f32.mrf.mxu0
    %v2203 = vadd.f32 %v1750, %v2202
    %v2204 = vpop.f32.mrf.mxu0
    %v2205 = vpop.f32.mrf.mxu0
    %v2206 = vadd.f32 %v1750, %v2205
    %v2207 = vpop.f32.mrf.mxu0
    %2208 = vmatprep.mubr.bf16.mxu0 %v1189
    %2209 = vmatmul.mubr.bf16.gmra.mxu0 %v1117
    %v2210 = vpop.f32.mrf.mxu0
    %v2211 = vadd.f32 %v1750, %v2210
    %v2212 = vpop.f32.mrf.mxu0
    %v2213 = vpop.f32.mrf.mxu0
    %v2214 = vadd.f32 %v1750, %v2213
    %v2215 = vpop.f32.mrf.mxu0
    %2216 = vmatprep.mubr.bf16.mxu0 %v1190
    %2217 = vmatmul.mubr.bf16.gmra.mxu0 %v1118
    %v2218 = vpop.f32.mrf.mxu0
    %v2219 = vadd.f32 %v1750, %v2218
    %v2220 = vpop.f32.mrf.mxu0
    %v2221 = vpop.f32.mrf.mxu0
    %v2222 = vadd.f32 %v1750, %v2221
    %v2223 = vpop.f32.mrf.mxu0
    %2224 = vmatprep.mubr.bf16.mxu0 %v1191
    %2225 = vmatmul.mubr.bf16.gmra.mxu0 %v1119
    %v2226 = vpop.f32.mrf.mxu0
    %v2227 = vadd.f32 %v1750, %v2226
    %v2228 = vpop.f32.mrf.mxu0
    %v2229 = vpop.f32.mrf.mxu0
    %v2230 = vadd.f32 %v1750, %v2229
    %v2231 = vpop.f32.mrf.mxu0
    %2232 = vdwg.mxu0
    %2233 = vmatprep.subr.bf16.mxu0 0
    %2234 = vmatpush1.bf16.msra.mxu0 %v1903
    %2235 = vmatprep.subr.bf16.mxu0 0
    %2236 = vmatpush1.bf16.msra.mxu0 %v1902
    %2237 = vmatprep.subr.bf16.mxu0 0
    %2238 = vmatpush1.bf16.msra.mxu0 %v1901
    %2239 = vmatprep.subr.bf16.mxu0 0
    %2240 = vmatpush1.bf16.msra.mxu0 %v1900
    %2241 = vmatprep.subr.bf16.mxu0 0
    %2242 = vmatpush1.bf16.msra.mxu0 %v1899
    %2243 = vmatprep.subr.bf16.mxu0 0
    %2244 = vmatpush1.bf16.msra.mxu0 %v1898
    %2245 = vmatprep.subr.bf16.mxu0 0
    %2246 = vmatpush1.bf16.msra.mxu0 %v1897
    %2247 = vmatprep.subr.bf16.mxu0 0
    %2248 = vmatpush1.bf16.msra.mxu0 %v1896
    %2249 = vmatprep.subr.bf16.mxu0 0
    %2250 = vmatpush2.bf16.msra.mxu0 %v1911
    %2251 = vmatprep.subr.bf16.mxu0 0
    %2252 = vmatpush2.bf16.msra.mxu0 %v1910
    %2253 = vmatprep.subr.bf16.mxu0 0
    %2254 = vmatpush2.bf16.msra.mxu0 %v1909
    %2255 = vmatprep.subr.bf16.mxu0 0
    %2256 = vmatpush2.bf16.msra.mxu0 %v1908
    %2257 = vmatprep.subr.bf16.mxu0 0
    %2258 = vmatpush2.bf16.msra.mxu0 %v1907
    %2259 = vmatprep.subr.bf16.mxu0 0
    %2260 = vmatpush2.bf16.msra.mxu0 %v1906
    %2261 = vmatprep.subr.bf16.mxu0 0
    %2262 = vmatpush2.bf16.msra.mxu0 %v1905
    %2263 = vmatprep.subr.bf16.mxu0 0
    %2264 = vmatpush2.bf16.msra.mxu0 %v1904
    %2265 = vmatprep.mubr.bf16.mxu0 %v1471
    %2266 = vmatmul.mubr.bf16.gmra.mxu0 %v1459
    %v2267 = vpop.f32.mrf.mxu0
    %v2268 = vadd.f32 %v1979, %v2267
    %v2269 = vpop.f32.mrf.mxu0
    %v2270 = vpop.f32.mrf.mxu0
    %v2271 = vadd.f32 %v1982, %v2270
    %v2272 = vpop.f32.mrf.mxu0
    %2273 = vmatprep.mubr.bf16.mxu0 %v1474
    %2274 = vmatmul.mubr.bf16.gmra.mxu0 %v1462
    %v2275 = vpop.f32.mrf.mxu0
    %v2276 = vadd.f32 %v1987, %v2275
    %v2277 = vpop.f32.mrf.mxu0
    %v2278 = vpop.f32.mrf.mxu0
    %v2279 = vadd.f32 %v1990, %v2278
    %v2280 = vpop.f32.mrf.mxu0
    %2281 = vmatprep.mubr.bf16.mxu0 %v1477
    %2282 = vmatmul.mubr.bf16.gmra.mxu0 %v1465
    %v2283 = vpop.f32.mrf.mxu0
    %v2284 = vadd.f32 %v1995, %v2283
    %v2285 = vpop.f32.mrf.mxu0
    %v2286 = vpop.f32.mrf.mxu0
    %v2287 = vadd.f32 %v1998, %v2286
    %v2288 = vpop.f32.mrf.mxu0
    %2289 = vmatprep.mubr.bf16.mxu0 %v1480
    %2290 = vmatmul.mubr.bf16.gmra.mxu0 %v1468
    %v2291 = vpop.f32.mrf.mxu0
    %v2292 = vadd.f32 %v2003, %v2291
    %v2293 = vpop.f32.mrf.mxu0
    %v2294 = vpop.f32.mrf.mxu0
    %v2295 = vadd.f32 %v2006, %v2294
    %v2296 = vpop.f32.mrf.mxu0
    %2297 = vmatprep.mubr.bf16.mxu0 %v1483
    %2298 = vmatmul.mubr.bf16.gmra.mxu0 %v1471
    %v2299 = vpop.f32.mrf.mxu0
    %v2300 = vadd.f32 %v2011, %v2299
    %v2301 = vpop.f32.mrf.mxu0
    %v2302 = vpop.f32.mrf.mxu0
    %v2303 = vadd.f32 %v2014, %v2302
    %v2304 = vpop.f32.mrf.mxu0
    %2305 = vmatprep.mubr.bf16.mxu0 %v1486
    %2306 = vmatmul.mubr.bf16.gmra.mxu0 %v1474
    %v2307 = vpop.f32.mrf.mxu0
    %v2308 = vadd.f32 %v2019, %v2307
    %v2309 = vpop.f32.mrf.mxu0
    %v2310 = vpop.f32.mrf.mxu0
    %v2311 = vadd.f32 %v2022, %v2310
    %v2312 = vpop.f32.mrf.mxu0
    %2313 = vmatprep.mubr.bf16.mxu0 %v1489
    %2314 = vmatmul.mubr.bf16.gmra.mxu0 %v1477
    %v2315 = vpop.f32.mrf.mxu0
    %v2316 = vadd.f32 %v2027, %v2315
    %v2317 = vpop.f32.mrf.mxu0
    %v2318 = vpop.f32.mrf.mxu0
    %v2319 = vadd.f32 %v2030, %v2318
    %v2320 = vpop.f32.mrf.mxu0
    %2321 = vmatprep.mubr.bf16.mxu0 %v1492
    %2322 = vmatmul.mubr.bf16.gmra.mxu0 %v1480
    %v2323 = vpop.f32.mrf.mxu0
    %v2324 = vadd.f32 %v2035, %v2323
    %v2325 = vpop.f32.mrf.mxu0
    %v2326 = vpop.f32.mrf.mxu0
    %v2327 = vadd.f32 %v2038, %v2326
    %v2328 = vpop.f32.mrf.mxu0
    %2329 = vmatprep.mubr.bf16.mxu0 %v1495
    %2330 = vmatmul.mubr.bf16.gmra.mxu0 %v1483
    %v2331 = vpop.f32.mrf.mxu0
    %v2332 = vadd.f32 %v2043, %v2331
    %v2333 = vpop.f32.mrf.mxu0
    %v2334 = vpop.f32.mrf.mxu0
    %v2335 = vadd.f32 %v2046, %v2334
    %v2336 = vpop.f32.mrf.mxu0
    %2337 = vmatprep.mubr.bf16.mxu0 %v1498
    %2338 = vmatmul.mubr.bf16.gmra.mxu0 %v1486
    %v2339 = vpop.f32.mrf.mxu0
    %v2340 = vadd.f32 %v2051, %v2339
    %v2341 = vpop.f32.mrf.mxu0
    %v2342 = vpop.f32.mrf.mxu0
    %v2343 = vadd.f32 %v2054, %v2342
    %v2344 = vpop.f32.mrf.mxu0
    %2345 = vmatprep.mubr.bf16.mxu0 %v1501
    %2346 = vmatmul.mubr.bf16.gmra.mxu0 %v1489
    %v2347 = vpop.f32.mrf.mxu0
    %v2348 = vadd.f32 %v2059, %v2347
    %v2349 = vpop.f32.mrf.mxu0
    %v2350 = vpop.f32.mrf.mxu0
    %v2351 = vadd.f32 %v2062, %v2350
    %v2352 = vpop.f32.mrf.mxu0
    %2353 = vmatprep.mubr.bf16.mxu0 %v1504
    %2354 = vmatmul.mubr.bf16.gmra.mxu0 %v1492
    %v2355 = vpop.f32.mrf.mxu0
    %v2356 = vadd.f32 %v2067, %v2355
    %v2357 = vpop.f32.mrf.mxu0
    %v2358 = vpop.f32.mrf.mxu0
    %v2359 = vadd.f32 %v2070, %v2358
    %v2360 = vpop.f32.mrf.mxu0
    %2361 = vmatprep.mubr.bf16.mxu0 %v1651
    %2362 = vmatmul.mubr.bf16.gmra.mxu0 %v1495
    %v2363 = vpop.f32.mrf.mxu0
    %v2364 = vadd.f32 %v2075, %v2363
    %v2365 = vpop.f32.mrf.mxu0
    %v2366 = vpop.f32.mrf.mxu0
    %v2367 = vadd.f32 %v2078, %v2366
    %v2368 = vpop.f32.mrf.mxu0
    %2369 = vmatprep.mubr.bf16.mxu0 %v1654
    %2370 = vmatmul.mubr.bf16.gmra.mxu0 %v1498
    %v2371 = vpop.f32.mrf.mxu0
    %v2372 = vadd.f32 %v2083, %v2371
    %v2373 = vpop.f32.mrf.mxu0
    %v2374 = vpop.f32.mrf.mxu0
    %v2375 = vadd.f32 %v2086, %v2374
    %v2376 = vpop.f32.mrf.mxu0
    %2377 = vmatprep.mubr.bf16.mxu0 %v1657
    %2378 = vmatmul.mubr.bf16.gmra.mxu0 %v1501
    %v2379 = vpop.f32.mrf.mxu0
    %v2380 = vadd.f32 %v2091, %v2379
    %v2381 = vpop.f32.mrf.mxu0
    %v2382 = vpop.f32.mrf.mxu0
    %v2383 = vadd.f32 %v2094, %v2382
    %v2384 = vpop.f32.mrf.mxu0
    %2385 = vmatprep.mubr.bf16.mxu0 %v1660
    %2386 = vmatmul.mubr.bf16.gmra.mxu0 %v1504
    %v2387 = vpop.f32.mrf.mxu0
    %v2388 = vadd.f32 %v2099, %v2387
    %v2389 = vpop.f32.mrf.mxu0
    %v2390 = vpop.f32.mrf.mxu0
    %v2391 = vadd.f32 %v2102, %v2390
    %v2392 = vpop.f32.mrf.mxu0
    %2393 = vmatprep.mubr.bf16.mxu0 %v1519
    %2394 = vmatmul.mubr.bf16.gmra.mxu0 %v1507
    %v2395 = vpop.f32.mrf.mxu0
    %v2396 = vadd.f32 %v2107, %v2395
    %v2397 = vpop.f32.mrf.mxu0
    %v2398 = vpop.f32.mrf.mxu0
    %v2399 = vadd.f32 %v2110, %v2398
    %v2400 = vpop.f32.mrf.mxu0
    %2401 = vmatprep.mubr.bf16.mxu0 %v1522
    %2402 = vmatmul.mubr.bf16.gmra.mxu0 %v1510
    %v2403 = vpop.f32.mrf.mxu0
    %v2404 = vadd.f32 %v2115, %v2403
    %v2405 = vpop.f32.mrf.mxu0
    %v2406 = vpop.f32.mrf.mxu0
    %v2407 = vadd.f32 %v2118, %v2406
    %v2408 = vpop.f32.mrf.mxu0
    %2409 = vmatprep.mubr.bf16.mxu0 %v1525
    %2410 = vmatmul.mubr.bf16.gmra.mxu0 %v1513
    %v2411 = vpop.f32.mrf.mxu0
    %v2412 = vadd.f32 %v2123, %v2411
    %v2413 = vpop.f32.mrf.mxu0
    %v2414 = vpop.f32.mrf.mxu0
    %v2415 = vadd.f32 %v2126, %v2414
    %v2416 = vpop.f32.mrf.mxu0
    %2417 = vmatprep.mubr.bf16.mxu0 %v1528
    %2418 = vmatmul.mubr.bf16.gmra.mxu0 %v1516
    %v2419 = vpop.f32.mrf.mxu0
    %v2420 = vadd.f32 %v2131, %v2419
    %v2421 = vpop.f32.mrf.mxu0
    %v2422 = vpop.f32.mrf.mxu0
    %v2423 = vadd.f32 %v2134, %v2422
    %v2424 = vpop.f32.mrf.mxu0
    %2425 = vmatprep.mubr.bf16.mxu0 %v1531
    %2426 = vmatmul.mubr.bf16.gmra.mxu0 %v1519
    %v2427 = vpop.f32.mrf.mxu0
    %v2428 = vadd.f32 %v2139, %v2427
    %v2429 = vpop.f32.mrf.mxu0
    %v2430 = vpop.f32.mrf.mxu0
    %v2431 = vadd.f32 %v2142, %v2430
    %v2432 = vpop.f32.mrf.mxu0
    %2433 = vmatprep.mubr.bf16.mxu0 %v1534
    %2434 = vmatmul.mubr.bf16.gmra.mxu0 %v1522
    %v2435 = vpop.f32.mrf.mxu0
    %v2436 = vadd.f32 %v2147, %v2435
    %v2437 = vpop.f32.mrf.mxu0
    %v2438 = vpop.f32.mrf.mxu0
    %v2439 = vadd.f32 %v2150, %v2438
    %v2440 = vpop.f32.mrf.mxu0
    %2441 = vmatprep.mubr.bf16.mxu0 %v1537
    %2442 = vmatmul.mubr.bf16.gmra.mxu0 %v1525
    %v2443 = vpop.f32.mrf.mxu0
    %v2444 = vadd.f32 %v2155, %v2443
    %v2445 = vpop.f32.mrf.mxu0
    %v2446 = vpop.f32.mrf.mxu0
    %v2447 = vadd.f32 %v2158, %v2446
    %v2448 = vpop.f32.mrf.mxu0
    %2449 = vmatprep.mubr.bf16.mxu0 %v1540
    %2450 = vmatmul.mubr.bf16.gmra.mxu0 %v1528
    %v2451 = vpop.f32.mrf.mxu0
    %v2452 = vadd.f32 %v2163, %v2451
    %v2453 = vpop.f32.mrf.mxu0
    %v2454 = vpop.f32.mrf.mxu0
    %v2455 = vadd.f32 %v2166, %v2454
    %v2456 = vpop.f32.mrf.mxu0
    %2457 = vmatprep.mubr.bf16.mxu0 %v1543
    %2458 = vmatmul.mubr.bf16.gmra.mxu0 %v1531
    %v2459 = vpop.f32.mrf.mxu0
    %v2460 = vadd.f32 %v2171, %v2459
    %v2461 = vpop.f32.mrf.mxu0
    %v2462 = vpop.f32.mrf.mxu0
    %v2463 = vadd.f32 %v2174, %v2462
    %v2464 = vpop.f32.mrf.mxu0
    %2465 = vmatprep.mubr.bf16.mxu0 %v1546
    %2466 = vmatmul.mubr.bf16.gmra.mxu0 %v1534
    %v2467 = vpop.f32.mrf.mxu0
    %v2468 = vadd.f32 %v2179, %v2467
    %v2469 = vpop.f32.mrf.mxu0
    %v2470 = vpop.f32.mrf.mxu0
    %v2471 = vadd.f32 %v2182, %v2470
    %v2472 = vpop.f32.mrf.mxu0
    %2473 = vmatprep.mubr.bf16.mxu0 %v1549
    %2474 = vmatmul.mubr.bf16.gmra.mxu0 %v1537
    %v2475 = vpop.f32.mrf.mxu0
    %v2476 = vadd.f32 %v2187, %v2475
    %v2477 = vpop.f32.mrf.mxu0
    %v2478 = vpop.f32.mrf.mxu0
    %v2479 = vadd.f32 %v2190, %v2478
    %v2480 = vpop.f32.mrf.mxu0
    %2481 = vmatprep.mubr.bf16.mxu0 %v1552
    %2482 = vmatmul.mubr.bf16.gmra.mxu0 %v1540
    %v2483 = vpop.f32.mrf.mxu0
    %v2484 = vadd.f32 %v2195, %v2483
    %v2485 = vpop.f32.mrf.mxu0
    %v2486 = vpop.f32.mrf.mxu0
    %v2487 = vadd.f32 %v2198, %v2486
    %v2488 = vpop.f32.mrf.mxu0
    %2489 = vmatprep.mubr.bf16.mxu0 %v1663
    %2490 = vmatmul.mubr.bf16.gmra.mxu0 %v1543
    %v2491 = vpop.f32.mrf.mxu0
    %v2492 = vadd.f32 %v2203, %v2491
    %v2493 = vpop.f32.mrf.mxu0
    %v2494 = vpop.f32.mrf.mxu0
    %v2495 = vadd.f32 %v2206, %v2494
    %v2496 = vpop.f32.mrf.mxu0
    %2497 = vmatprep.mubr.bf16.mxu0 %v1666
    %2498 = vmatmul.mubr.bf16.gmra.mxu0 %v1546
    %v2499 = vpop.f32.mrf.mxu0
    %v2500 = vadd.f32 %v2211, %v2499
    %v2501 = vpop.f32.mrf.mxu0
    %v2502 = vpop.f32.mrf.mxu0
    %v2503 = vadd.f32 %v2214, %v2502
    %v2504 = vpop.f32.mrf.mxu0
    %2505 = vmatprep.mubr.bf16.mxu0 %v1669
    %2506 = vmatmul.mubr.bf16.gmra.mxu0 %v1549
    %v2507 = vpop.f32.mrf.mxu0
    %v2508 = vadd.f32 %v2219, %v2507
    %v2509 = vpop.f32.mrf.mxu0
    %v2510 = vpop.f32.mrf.mxu0
    %v2511 = vadd.f32 %v2222, %v2510
    %v2512 = vpop.f32.mrf.mxu0
    %2513 = vmatprep.mubr.bf16.mxu0 %v1672
    %2514 = vmatmul.mubr.bf16.gmra.mxu0 %v1552
    %v2515 = vpop.f32.mrf.mxu0
    %v2516 = vadd.f32 %v2227, %v2515
    %v2517 = vpop.f32.mrf.mxu0
    %v2518 = vpop.f32.mrf.mxu0
    %v2519 = vadd.f32 %v2230, %v2518
    %v2520 = vpop.f32.mrf.mxu0
    %2521 = vdwg.mxu0
    %v2522 = vmax.f32 %v2268, 0.0
    %v2523 = vmax.f32 %v2271, 0.0
    %v2524 = vmax.f32 %v2276, 0.0
    %v2525 = vmax.f32 %v2279, 0.0
    %v2526 = vmax.f32 %v2284, 0.0
    %v2527 = vmax.f32 %v2287, 0.0
    %v2528 = vmax.f32 %v2292, 0.0
    %v2529 = vmax.f32 %v2295, 0.0
    %v2530 = vmax.f32 %v2300, 0.0
    %v2531 = vmax.f32 %v2303, 0.0
    %v2532 = vmax.f32 %v2308, 0.0
    %v2533 = vmax.f32 %v2311, 0.0
    %v2534 = vmax.f32 %v2316, 0.0
    %v2535 = vmax.f32 %v2319, 0.0
    %v2536 = vmax.f32 %v2324, 0.0
    %v2537 = vmax.f32 %v2327, 0.0
    %v2538 = vmax.f32 %v2332, 0.0
    %v2539 = vmax.f32 %v2335, 0.0
    %v2540 = vmax.f32 %v2340, 0.0
    %v2541 = vmax.f32 %v2343, 0.0
    %v2542 = vmax.f32 %v2348, 0.0
    %v2543 = vmax.f32 %v2351, 0.0
    %v2544 = vmax.f32 %v2356, 0.0
    %v2545 = vmax.f32 %v2359, 0.0
    %v2546 = vmax.f32 %v2364, 0.0
    %v2547 = vmax.f32 %v2367, 0.0
    %v2548 = vmax.f32 %v2372, 0.0
    %v2549 = vmax.f32 %v2375, 0.0
    %v2550 = vmax.f32 %v2380, 0.0
    %v2551 = vmax.f32 %v2383, 0.0
    %v2552 = vmax.f32 %v2388, 0.0
    %v2553 = vmax.f32 %v2391, 0.0
    %v2554 = vmax.f32 %v2396, 0.0
    %v2555 = vmax.f32 %v2399, 0.0
    %v2556 = vmax.f32 %v2404, 0.0
    %v2557 = vmax.f32 %v2407, 0.0
    %v2558 = vmax.f32 %v2412, 0.0
    %v2559 = vmax.f32 %v2415, 0.0
    %v2560 = vmax.f32 %v2420, 0.0
    %v2561 = vmax.f32 %v2423, 0.0
    %v2562 = vmax.f32 %v2428, 0.0
    %v2563 = vmax.f32 %v2431, 0.0
    %v2564 = vmax.f32 %v2436, 0.0
    %v2565 = vmax.f32 %v2439, 0.0
    %v2566 = vmax.f32 %v2444, 0.0
    %v2567 = vmax.f32 %v2447, 0.0
    %v2568 = vmax.f32 %v2452, 0.0
    %v2569 = vmax.f32 %v2455, 0.0
    %v2570 = vmax.f32 %v2460, 0.0
    %v2571 = vmax.f32 %v2463, 0.0
    %v2572 = vmax.f32 %v2468, 0.0
    %v2573 = vmax.f32 %v2471, 0.0
    %v2574 = vmax.f32 %v2476, 0.0
    %v2575 = vmax.f32 %v2479, 0.0
    %v2576 = vmax.f32 %v2484, 0.0
    %v2577 = vmax.f32 %v2487, 0.0
    %v2578 = vmax.f32 %v2492, 0.0
    %v2579 = vmax.f32 %v2495, 0.0
    %v2580 = vmax.f32 %v2500, 0.0
    %v2581 = vmax.f32 %v2503, 0.0
    %v2582 = vmax.f32 %v2508, 0.0
    %v2583 = vmax.f32 %v2511, 0.0
    %v2584 = vmax.f32 %v2516, 0.0
    %v2585 = vmax.f32 %v2519, 0.0
    %v2586 = vadd.f32 %v2522, %v2523
    %v2587 = vadd.f32 %v2586, %v2524
    %v2588 = vadd.f32 %v2587, %v2525
    %v2589 = vadd.f32 %v2588, %v2526
    %v2590 = vadd.f32 %v2589, %v2527
    %v2591 = vadd.f32 %v2590, %v2528
    %v2592 = vadd.f32 %v2591, %v2529
    %v2593 = vadd.f32 %v2592, %v2530
    %v2594 = vadd.f32 %v2593, %v2531
    %v2595 = vadd.f32 %v2594, %v2532
    %v2596 = vadd.f32 %v2595, %v2533
    %v2597 = vadd.f32 %v2596, %v2534
    %v2598 = vadd.f32 %v2597, %v2535
    %v2599 = vadd.f32 %v2598, %v2536
    %v2600 = vadd.f32 %v2599, %v2537
    %v2601 = vadd.f32 %v2600, %v2538
    %v2602 = vadd.f32 %v2601, %v2539
    %v2603 = vadd.f32 %v2602, %v2540
    %v2604 = vadd.f32 %v2603, %v2541
    %v2605 = vadd.f32 %v2604, %v2542
    %v2606 = vadd.f32 %v2605, %v2543
    %v2607 = vadd.f32 %v2606, %v2544
    %v2608 = vadd.f32 %v2607, %v2545
    %v2609 = vadd.f32 %v2608, %v2546
    %v2610 = vadd.f32 %v2609, %v2547
    %v2611 = vadd.f32 %v2610, %v2548
    %v2612 = vadd.f32 %v2611, %v2549
    %v2613 = vadd.f32 %v2612, %v2550
    %v2614 = vadd.f32 %v2613, %v2551
    %v2615 = vadd.f32 %v2614, %v2552
    %v2616 = vadd.f32 %v2615, %v2553
    %v2617 = vrot.slane %v2616, 4
    %v2618 = vadd.f32 %v2616, %v2617
    %v2619 = vrot.slane %v2618, 2
    %v2620 = vadd.f32 %v2618, %v2619
    %v2621 = vrot.slane %v2620, 1
    %v2622 = vadd.f32 %v2620, %v2621
    %v2623 = vadd.f32 %v2554, %v2555
    %v2624 = vadd.f32 %v2623, %v2556
    %v2625 = vadd.f32 %v2624, %v2557
    %v2626 = vadd.f32 %v2625, %v2558
    %v2627 = vadd.f32 %v2626, %v2559
    %v2628 = vadd.f32 %v2627, %v2560
    %v2629 = vadd.f32 %v2628, %v2561
    %v2630 = vadd.f32 %v2629, %v2562
    %v2631 = vadd.f32 %v2630, %v2563
    %v2632 = vadd.f32 %v2631, %v2564
    %v2633 = vadd.f32 %v2632, %v2565
    %v2634 = vadd.f32 %v2633, %v2566
    %v2635 = vadd.f32 %v2634, %v2567
    %v2636 = vadd.f32 %v2635, %v2568
    %v2637 = vadd.f32 %v2636, %v2569
    %v2638 = vadd.f32 %v2637, %v2570
    %v2639 = vadd.f32 %v2638, %v2571
    %v2640 = vadd.f32 %v2639, %v2572
    %v2641 = vadd.f32 %v2640, %v2573
    %v2642 = vadd.f32 %v2641, %v2574
    %v2643 = vadd.f32 %v2642, %v2575
    %v2644 = vadd.f32 %v2643, %v2576
    %v2645 = vadd.f32 %v2644, %v2577
    %v2646 = vadd.f32 %v2645, %v2578
    %v2647 = vadd.f32 %v2646, %v2579
    %v2648 = vadd.f32 %v2647, %v2580
    %v2649 = vadd.f32 %v2648, %v2581
    %v2650 = vadd.f32 %v2649, %v2582
    %v2651 = vadd.f32 %v2650, %v2583
    %v2652 = vadd.f32 %v2651, %v2584
    %v2653 = vadd.f32 %v2652, %v2585
    %v2654 = vrot.slane %v2653, 4
    %v2655 = vadd.f32 %v2653, %v2654
    %v2656 = vrot.slane %v2655, 2
    %v2657 = vadd.f32 %v2655, %v2656
    %v2658 = vrot.slane %v2657, 1
    %v2659 = vadd.f32 %v2657, %v2658
    %v2660 = vmul.f32 %v2622, 0.00390625
    %v2661 = vmul.f32 %v2659, 0.00390625
    %v2662 = vpack.c.bf16 %v2660, %v2660
    %v2663 = vpack.c.bf16 %v2661, %v2661
    %v2664 = vld [vmem:[%s3] sm:$0xf]
    %v2665 = vld [vmem:[%s3 + $0x4] sm:$0xf]
    %v2666 = vld [vmem:[%s3 + $0x8] sm:$0xf]
    %v2667 = vld [vmem:[%s3 + $0xc] sm:$0xf]
    %v2668 = vld [vmem:[%s3 + $0x10] sm:$0xf]
    %v2669 = vld [vmem:[%s3 + $0x14] sm:$0xf]
    %v2670 = vld [vmem:[%s3 + $0x18] sm:$0xf]
    %v2671 = vld [vmem:[%s3 + $0x1c] sm:$0xf]
    %v2672 = vld [vmem:[%s3 + $0x20] sm:$0xf]
    %v2673 = vld [vmem:[%s3 + $0x24] sm:$0xf]
    %v2674 = vld [vmem:[%s3 + $0x28] sm:$0xf]
    %v2675 = vld [vmem:[%s3 + $0x2c] sm:$0xf]
    %v2676 = vld [vmem:[%s3 + $0x30] sm:$0xf]
    %v2677 = vld [vmem:[%s3 + $0x34] sm:$0xf]
    %v2678 = vld [vmem:[%s3 + $0x38] sm:$0xf]
    %v2679 = vld [vmem:[%s3 + $0x3c] sm:$0xf]
    %v2680 = vld [vmem:[%s4] sm:$0x1]
    %v2682 = vlaneseq
    %v2683 = vshrl.u32 %v2682, 7
    %v2684 = vsub.s32 0, %v2683
    %v2685 = vrot.slane %v2680, %v2684
    %v2689 = vunpack.c.l.b16 %v2662
    %v2690 = vunpack.c.l.b16 %v2663
    %vm2691 = vcmask 1041409
    %v2692 = vsel %vm2691, %v2690, %v2689
    %v2693 = vpack.c.b16 %v2692, %v2692
    %v2711 = vunpack.c.l.b16 %v2664
    %v2712 = vunpack.c.l.b16 %v2665
    %v2713 = vunpack.c.l.b16 %v2666
    %v2714 = vunpack.c.l.b16 %v2667
    %v2715 = vunpack.c.l.b16 %v2668
    %v2716 = vunpack.c.l.b16 %v2669
    %v2717 = vunpack.c.l.b16 %v2670
    %v2718 = vunpack.c.l.b16 %v2671
    %v2719 = vunpack.c.l.b16 %v2672
    %v2720 = vunpack.c.l.b16 %v2673
    %v2721 = vunpack.c.l.b16 %v2674
    %v2722 = vunpack.c.l.b16 %v2675
    %v2723 = vunpack.c.l.b16 %v2676
    %v2724 = vunpack.c.l.b16 %v2677
    %v2725 = vunpack.c.l.b16 %v2678
    %v2726 = vunpack.c.l.b16 %v2679
    %v2727 = vpack.c.b16 %v2712, %v2711
    %v2728 = vpack.c.b16 %v2714, %v2713
    %v2729 = vpack.c.b16 %v2716, %v2715
    %v2730 = vpack.c.b16 %v2718, %v2717
    %v2731 = vpack.c.b16 %v2720, %v2719
    %v2732 = vpack.c.b16 %v2722, %v2721
    %v2733 = vpack.c.b16 %v2724, %v2723
    %v2734 = vpack.c.b16 %v2726, %v2725
    %2743 = vmatprep.subr.bf16.mxu0 0
    %2744 = vmatpush1.bf16.msra.mxu0 %v2734
    %2745 = vmatprep.subr.bf16.mxu0 0
    %2746 = vmatpush1.bf16.msra.mxu0 %v2733
    %2747 = vmatprep.subr.bf16.mxu0 0
    %2748 = vmatpush1.bf16.msra.mxu0 %v2732
    %2749 = vmatprep.subr.bf16.mxu0 0
    %2750 = vmatpush1.bf16.msra.mxu0 %v2731
    %2751 = vmatprep.subr.bf16.mxu0 0
    %2752 = vmatpush1.bf16.msra.mxu0 %v2730
    %2753 = vmatprep.subr.bf16.mxu0 0
    %2754 = vmatpush1.bf16.msra.mxu0 %v2729
    %2755 = vmatprep.subr.bf16.mxu0 0
    %2756 = vmatpush1.bf16.msra.mxu0 %v2728
    %2757 = vmatprep.subr.bf16.mxu0 0
    %2758 = vmatpush1.bf16.msra.mxu0 %v2727
    %2759 = vmatprep.subr.bf16.mxu0 0
    %2760 = vmatpush2.bf16.msra.mxu0 0
    %2761 = vmatprep.subr.bf16.mxu0 0
    %2762 = vmatpush2.bf16.msra.mxu0 0
    %2763 = vmatprep.subr.bf16.mxu0 0
    %2764 = vmatpush2.bf16.msra.mxu0 0
    %2765 = vmatprep.subr.bf16.mxu0 0
    %2766 = vmatpush2.bf16.msra.mxu0 0
    %2767 = vmatprep.subr.bf16.mxu0 0
    %2768 = vmatpush2.bf16.msra.mxu0 0
    %2769 = vmatprep.subr.bf16.mxu0 0
    %2770 = vmatpush2.bf16.msra.mxu0 0
    %2771 = vmatprep.subr.bf16.mxu0 0
    %2772 = vmatpush2.bf16.msra.mxu0 0
    %2773 = vmatprep.subr.bf16.mxu0 0
    %2774 = vmatpush2.bf16.msra.mxu0 0
    %2775 = vmatprep.mubr.bf16.mxu0 0
    %2776 = vmatmul.mubr.bf16.gmra.mxu0 %v2693
    %v2777 = vpop.f32.mrf.mxu0
    %v2778 = vadd.f32 %v2685, %v2777
    %v2779 = vpop.f32.mrf.mxu0
    %v2780 = vpop.f32.mrf.mxu0
    %v2781 = vpop.f32.mrf.mxu0
    %2782 = vdwg.mxu0
    %v2783 = vmax.f32 %v2778, 0.0
    %v2784 = vpack.c.bf16 %v2783, %v2783
    %v2785 = vld [vmem:[%s5] sm:$0xf]
    %v2786 = vld [vmem:[%s5 + $0x4] sm:$0xf]
    %v2787 = vld [vmem:[%s6] sm:$0x1]
    %v2789 = vlaneseq
    %v2790 = vshrl.u32 %v2789, 7
    %v2791 = vsub.s32 0, %v2790
    %v2792 = vrot.slane %v2787, %v2791
    %v2796 = vunpack.c.l.b16 %v2785
    %v2797 = vunpack.c.l.b16 %v2786
    %v2798 = vpack.c.b16 %v2797, %v2796
    %vm2800 = vcmask 130048
    %v2802 = vsel %vm2800, %v2784, 0
    %2804 = vmatprep.subr.bf16.mxu0 0
    %2805 = vmatpush1.bf16.msra.mxu0 0
    %2806 = vmatprep.subr.bf16.mxu0 0
    %2807 = vmatpush1.bf16.msra.mxu0 0
    %2808 = vmatprep.subr.bf16.mxu0 0
    %2809 = vmatpush1.bf16.msra.mxu0 0
    %2810 = vmatprep.subr.bf16.mxu0 0
    %2811 = vmatpush1.bf16.msra.mxu0 0
    %2812 = vmatprep.subr.bf16.mxu0 0
    %2813 = vmatpush1.bf16.msra.mxu0 0
    %2814 = vmatprep.subr.bf16.mxu0 0
    %2815 = vmatpush1.bf16.msra.mxu0 0
    %2816 = vmatprep.subr.bf16.mxu0 0
    %2817 = vmatpush1.bf16.msra.mxu0 0
    %2818 = vmatprep.subr.bf16.mxu0 0
    %2819 = vmatpush1.bf16.msra.mxu0 %v2798
    %2820 = vmatprep.subr.bf16.mxu0 0
    %2821 = vmatpush2.bf16.msra.mxu0 0
    %2822 = vmatprep.subr.bf16.mxu0 0
    %2823 = vmatpush2.bf16.msra.mxu0 0
    %2824 = vmatprep.subr.bf16.mxu0 0
    %2825 = vmatpush2.bf16.msra.mxu0 0
    %2826 = vmatprep.subr.bf16.mxu0 0
    %2827 = vmatpush2.bf16.msra.mxu0 0
    %2828 = vmatprep.subr.bf16.mxu0 0
    %2829 = vmatpush2.bf16.msra.mxu0 0
    %2830 = vmatprep.subr.bf16.mxu0 0
    %2831 = vmatpush2.bf16.msra.mxu0 0
    %2832 = vmatprep.subr.bf16.mxu0 0
    %2833 = vmatpush2.bf16.msra.mxu0 0
    %2834 = vmatprep.subr.bf16.mxu0 0
    %2835 = vmatpush2.bf16.msra.mxu0 0
    %2836 = vmatprep.mubr.bf16.mxu0 0
    %2837 = vmatmul.mubr.bf16.gmra.mxu0 %v2802
    %v2838 = vpop.f32.mrf.mxu0
    %v2839 = vadd.f32 %v2792, %v2838
    %v2840 = vpop.f32.mrf.mxu0
    %v2841 = vpop.f32.mrf.mxu0
    %v2842 = vpop.f32.mrf.mxu0
    %2843 = vdwg.mxu0
    %v2844 = vxor.u32 %v2839, 2147483648
    %v2845 = vmul.f32 %v2844, 1.442695
    %v2846 = vpow.pop %v2845
    %v2847 = vadd.f32 %v2846, 1.0
    %v2848 = vrcp.pop %v2847
    %v2849 = vmul.f32 1.0, %v2848
    %v2852 = vunpack.c.l.s4 1966171168
    %v2853 = vunpack.c.0.s8 %v2852
    %v2854 = vlaneseq
    %v2855 = vshrl.u32 %v2854, 7
    %v2856 = vsub.s32 %v2853, %v2855
    %v2857 = vrot.slane %v2849, %v2856
    %v2858 = vcombine.high %v2857, %v2857
    %v2860 = vunpack.c.l.s4 1966171168
    %v2861 = vunpack.c.0.s8 %v2860
    %v2862 = vlaneseq
    %v2863 = vshrl.u32 %v2862, 7
    %v2864 = vsub.s32 %v2861, %v2863
    %v2865 = vrot.slane %v2857, %v2864
    %v2867 = vunpack.c.l.s4 1966171168
    %v2868 = vunpack.c.0.s8 %v2867
    %v2869 = vlaneseq
    %v2870 = vshrl.u32 %v2869, 7
    %v2871 = vsub.s32 %v2868, %v2870
    %v2872 = vrot.slane %v2858, %v2871
    %v2873 = vlaneseq
    %v2874 = vshrl.u32 %v2873, 7
    %v2875 = vsub.s32 0, %v2874
    %v2876 = vrot.slane %v2865, %v2875
    %v2877 = vlaneseq
    %v2878 = vshrl.u32 %v2877, 7
    %v2879 = vsub.s32 0, %v2878
    %v2880 = vrot.slane %v2872, %v2879
    %v2883 = vmul.f32 %v2522, %v2876
    %v2884 = vmul.f32 %v2523, %v2876
    %v2885 = vmul.f32 %v2524, %v2876
    %v2886 = vmul.f32 %v2525, %v2876
    %v2887 = vmul.f32 %v2526, %v2876
    %v2888 = vmul.f32 %v2527, %v2876
    %v2889 = vmul.f32 %v2528, %v2876
    %v2890 = vmul.f32 %v2529, %v2876
    %v2891 = vmul.f32 %v2530, %v2876
    %v2892 = vmul.f32 %v2531, %v2876
    %v2893 = vmul.f32 %v2532, %v2876
    %v2894 = vmul.f32 %v2533, %v2876
    %v2895 = vmul.f32 %v2534, %v2876
    %v2896 = vmul.f32 %v2535, %v2876
    %v2897 = vmul.f32 %v2536, %v2876
    %v2898 = vmul.f32 %v2537, %v2876
    %v2899 = vmul.f32 %v2538, %v2876
    %v2900 = vmul.f32 %v2539, %v2876
    %v2901 = vmul.f32 %v2540, %v2876
    %v2902 = vmul.f32 %v2541, %v2876
    %v2903 = vmul.f32 %v2542, %v2876
    %v2904 = vmul.f32 %v2543, %v2876
    %v2905 = vmul.f32 %v2544, %v2876
    %v2906 = vmul.f32 %v2545, %v2876
    %v2907 = vmul.f32 %v2546, %v2876
    %v2908 = vmul.f32 %v2547, %v2876
    %v2909 = vmul.f32 %v2548, %v2876
    %v2910 = vmul.f32 %v2549, %v2876
    %v2911 = vmul.f32 %v2550, %v2876
    %v2912 = vmul.f32 %v2551, %v2876
    %v2913 = vmul.f32 %v2552, %v2876
    %v2914 = vmul.f32 %v2553, %v2876
    %v2915 = vmul.f32 %v2554, %v2880
    %v2916 = vmul.f32 %v2555, %v2880
    %v2917 = vmul.f32 %v2556, %v2880
    %v2918 = vmul.f32 %v2557, %v2880
    %v2919 = vmul.f32 %v2558, %v2880
    %v2920 = vmul.f32 %v2559, %v2880
    %v2921 = vmul.f32 %v2560, %v2880
    %v2922 = vmul.f32 %v2561, %v2880
    %v2923 = vmul.f32 %v2562, %v2880
    %v2924 = vmul.f32 %v2563, %v2880
    %v2925 = vmul.f32 %v2564, %v2880
    %v2926 = vmul.f32 %v2565, %v2880
    %v2927 = vmul.f32 %v2566, %v2880
    %v2928 = vmul.f32 %v2567, %v2880
    %v2929 = vmul.f32 %v2568, %v2880
    %v2930 = vmul.f32 %v2569, %v2880
    %v2931 = vmul.f32 %v2570, %v2880
    %v2932 = vmul.f32 %v2571, %v2880
    %v2933 = vmul.f32 %v2572, %v2880
    %v2934 = vmul.f32 %v2573, %v2880
    %v2935 = vmul.f32 %v2574, %v2880
    %v2936 = vmul.f32 %v2575, %v2880
    %v2937 = vmul.f32 %v2576, %v2880
    %v2938 = vmul.f32 %v2577, %v2880
    %v2939 = vmul.f32 %v2578, %v2880
    %v2940 = vmul.f32 %v2579, %v2880
    %v2941 = vmul.f32 %v2580, %v2880
    %v2942 = vmul.f32 %v2581, %v2880
    %v2943 = vmul.f32 %v2582, %v2880
    %v2944 = vmul.f32 %v2583, %v2880
    %v2945 = vmul.f32 %v2584, %v2880
    %v2946 = vmul.f32 %v2585, %v2880
    %2947 = vst [vmem:[#allocation3] sm:$0xff] %v2883
    %2948 = vst [vmem:[#allocation3 + $0x8] sm:$0xff] %v2884
    %2949 = vst [vmem:[#allocation3 + $0x10] sm:$0xff] %v2885
    %2950 = vst [vmem:[#allocation3 + $0x18] sm:$0xff] %v2886
    %2951 = vst [vmem:[#allocation3 + $0x20] sm:$0xff] %v2887
    %2952 = vst [vmem:[#allocation3 + $0x28] sm:$0xff] %v2888
    %2953 = vst [vmem:[#allocation3 + $0x30] sm:$0xff] %v2889
    %2954 = vst [vmem:[#allocation3 + $0x38] sm:$0xff] %v2890
    %2955 = vst [vmem:[#allocation3 + $0x40] sm:$0xff] %v2891
    %2956 = vst [vmem:[#allocation3 + $0x48] sm:$0xff] %v2892
    %2957 = vst [vmem:[#allocation3 + $0x50] sm:$0xff] %v2893
    %2958 = vst [vmem:[#allocation3 + $0x58] sm:$0xff] %v2894
    %2959 = vst [vmem:[#allocation3 + $0x60] sm:$0xff] %v2895
    %2960 = vst [vmem:[#allocation3 + $0x68] sm:$0xff] %v2896
    %2961 = vst [vmem:[#allocation3 + $0x70] sm:$0xff] %v2897
    %2962 = vst [vmem:[#allocation3 + $0x78] sm:$0xff] %v2898
    %2963 = vst [vmem:[#allocation3 + $0x80] sm:$0xff] %v2899
    %2964 = vst [vmem:[#allocation3 + $0x88] sm:$0xff] %v2900
    %2965 = vst [vmem:[#allocation3 + $0x90] sm:$0xff] %v2901
    %2966 = vst [vmem:[#allocation3 + $0x98] sm:$0xff] %v2902
    %2967 = vst [vmem:[#allocation3 + $0xa0] sm:$0xff] %v2903
    %2968 = vst [vmem:[#allocation3 + $0xa8] sm:$0xff] %v2904
    %2969 = vst [vmem:[#allocation3 + $0xb0] sm:$0xff] %v2905
    %2970 = vst [vmem:[#allocation3 + $0xb8] sm:$0xff] %v2906
    %2971 = vst [vmem:[#allocation3 + $0xc0] sm:$0xff] %v2907
    %2972 = vst [vmem:[#allocation3 + $0xc8] sm:$0xff] %v2908
    %2973 = vst [vmem:[#allocation3 + $0xd0] sm:$0xff] %v2909
    %2974 = vst [vmem:[#allocation3 + $0xd8] sm:$0xff] %v2910
    %2975 = vst [vmem:[#allocation3 + $0xe0] sm:$0xff] %v2911
    %2976 = vst [vmem:[#allocation3 + $0xe8] sm:$0xff] %v2912
    %2977 = vst [vmem:[#allocation3 + $0xf0] sm:$0xff] %v2913
    %2978 = vst [vmem:[#allocation3 + $0xf8] sm:$0xff] %v2914
    %2979 = vst [vmem:[#allocation3 + $0x100] sm:$0xff] %v2915
    %2980 = vst [vmem:[#allocation3 + $0x108] sm:$0xff] %v2916
    %2981 = vst [vmem:[#allocation3 + $0x110] sm:$0xff] %v2917
    %2982 = vst [vmem:[#allocation3 + $0x118] sm:$0xff] %v2918
    %2983 = vst [vmem:[#allocation3 + $0x120] sm:$0xff] %v2919
    %2984 = vst [vmem:[#allocation3 + $0x128] sm:$0xff] %v2920
    %2985 = vst [vmem:[#allocation3 + $0x130] sm:$0xff] %v2921
    %2986 = vst [vmem:[#allocation3 + $0x138] sm:$0xff] %v2922
    %2987 = vst [vmem:[#allocation3 + $0x140] sm:$0xff] %v2923
    %2988 = vst [vmem:[#allocation3 + $0x148] sm:$0xff] %v2924
    %2989 = vst [vmem:[#allocation3 + $0x150] sm:$0xff] %v2925
    %2990 = vst [vmem:[#allocation3 + $0x158] sm:$0xff] %v2926
    %2991 = vst [vmem:[#allocation3 + $0x160] sm:$0xff] %v2927
    %2992 = vst [vmem:[#allocation3 + $0x168] sm:$0xff] %v2928
    %2993 = vst [vmem:[#allocation3 + $0x170] sm:$0xff] %v2929
    %2994 = vst [vmem:[#allocation3 + $0x178] sm:$0xff] %v2930
    %2995 = vst [vmem:[#allocation3 + $0x180] sm:$0xff] %v2931
    %2996 = vst [vmem:[#allocation3 + $0x188] sm:$0xff] %v2932
    %2997 = vst [vmem:[#allocation3 + $0x190] sm:$0xff] %v2933
    %2998 = vst [vmem:[#allocation3 + $0x198] sm:$0xff] %v2934
    %2999 = vst [vmem:[#allocation3 + $0x1a0] sm:$0xff] %v2935
    %3000 = vst [vmem:[#allocation3 + $0x1a8] sm:$0xff] %v2936
    %3001 = vst [vmem:[#allocation3 + $0x1b0] sm:$0xff] %v2937
    %3002 = vst [vmem:[#allocation3 + $0x1b8] sm:$0xff] %v2938
    %3003 = vst [vmem:[#allocation3 + $0x1c0] sm:$0xff] %v2939
    %3004 = vst [vmem:[#allocation3 + $0x1c8] sm:$0xff] %v2940
    %3005 = vst [vmem:[#allocation3 + $0x1d0] sm:$0xff] %v2941
    %3006 = vst [vmem:[#allocation3 + $0x1d8] sm:$0xff] %v2942
    %3007 = vst [vmem:[#allocation3 + $0x1e0] sm:$0xff] %v2943
    %3008 = vst [vmem:[#allocation3 + $0x1e8] sm:$0xff] %v2944
    %3009 = vst [vmem:[#allocation3 + $0x1f0] sm:$0xff] %v2945
    %3010 = vst [vmem:[#allocation3 + $0x1f8] sm:$0xff] %v2946
    // Predicated region
    $region30: #{sspcab_forward.1} parent=1 // pred_check
      _
    $region31: #{sspcab_forward.1} parent=1 // pred_check_branch
      %3012 = sbr.rel (0) target = $region33
    $region32: #{sspcab_forward.1} parent=1 // pred_region
      %s3014 = ssub.s32 8192, 8192
      %3015 = vsyncadd [#allocation4], %s3014
      %s3016 = sshll.u32 [#allocation3], 4
      %s3017 = int_to_ptr.vmem [resolvable:$true] %s3016
      %3022 = dma.vmem_to_hbm [thread:$0]  %s3017, 8192, %s7, [#allocation4], 128, 128, 8
    $region33: #{sspcab_forward.1} parent=1 // pred_fallthru
      _
    // Predicated region
    $region34: #{sspcab_forward.1} parent=1 // pred_check
      _
    $region35: #{sspcab_forward.1} parent=1 // pred_check_branch
      %3024 = sbr.rel (0) target = $region37
    $region36: #{sspcab_forward.1} parent=1 // pred_region
      %3025 = dma.done [#allocation4], 8192
    $region37: #{sspcab_forward.1} parent=1 // pred_fallthru
      _
    %3026 = vsyncpa [#allocation4], 1

</llo_original>
